<compile_context>
chip_gen: v7x
topology: tpu7x:2x2x1
jax: 0.10.0
libtpu: 0.0.40
codegen_flags: <defaults>
</compile_context>

<pallas_src>
import jax
import jax.numpy as jnp
from jax.experimental import pallas as pl
from jax.experimental.pallas import tpu as pltpu

COMPUTE_DTYPE = jnp.bfloat16      # MXU operand / activation storage dtype
VMEM_LIMIT = 32 * 1024 * 1024     # scoped-VMEM limit, safe on v5e/v6e/v7x


def _cdiv(a, b):
    return (a + b - 1) // b


def _lane_tiling(m, tmax, min_steps=2):
    """Pick (tile, padded_extent) for a lane axis of logical size m.

    tile is a multiple of 128, <= ~tmax; >= min_steps grid steps are used
    whenever the padded extent allows it (keeps both v7x TensorCores busy),
    and steps are balanced so padding waste is < one 128-lane group/step."""
    q = _cdiv(m, 128)                       # 128-lane groups needed
    steps = _cdiv(q, max(1, tmax // 128))
    if q >= min_steps:
        steps = max(steps, min_steps)
    tq = _cdiv(q, steps)
    return 128 * tq, 128 * tq * steps


# ---------------------------------------------------------------------------
# Pallas kernels
# ---------------------------------------------------------------------------
def _conv_relu_pool_kernel(w_ref, b_ref, p0_ref, p1_ref, p2_ref, p3_ref, o_ref):
    """out = relu(max_d(W @ P_d) + b)  ==  maxpool2x2(relu(conv(x) + b)).

    W: (OC, K) bf16, P_d: (K, TM) bf16 (tap d of each 2x2 pooling window),
    out: (OC, TM) bf16 with the pooled (ph, pw, n) axis lane-dense.
    ReLU/bias commute with the max because both are monotone; the epilogue
    stays f32 (v5e has no bf16 VPU) and only the store converts to bf16.
    """
    w = w_ref[...]
    z = jnp.dot(w, p0_ref[...], preferred_element_type=jnp.float32)
    z = jnp.maximum(z, jnp.dot(w, p1_ref[...], preferred_element_type=jnp.float32))
    z = jnp.maximum(z, jnp.dot(w, p2_ref[...], preferred_element_type=jnp.float32))
    z = jnp.maximum(z, jnp.dot(w, p3_ref[...], preferred_element_type=jnp.float32))
    o_ref[...] = jnp.maximum(z + b_ref[...], 0.0).astype(o_ref.dtype)


def _mlp_kernel(x_ref, w1_ref, b1_ref, w2_ref, b2_ref, w3_ref, b3_ref, o_ref):
    """Fused transposed classifier on one (400, TN) feature-major tile:
    logits^T = W3t @ relu(W2t @ relu(W1t @ x + b1) + b2) + b3.
    Intermediates live in vregs/VMEM only; batch (lane axis) is dense."""
    h = jnp.dot(w1_ref[...], x_ref[...], preferred_element_type=jnp.float32)
    h = jnp.maximum(h + b1_ref[...], 0.0)
    h = jnp.dot(w2_ref[...], h.astype(COMPUTE_DTYPE),
                preferred_element_type=jnp.float32)
    h = jnp.maximum(h + b2_ref[...], 0.0)
    h = jnp.dot(w3_ref[...], h.astype(COMPUTE_DTYPE),
                preferred_element_type=jnp.float32)
    o_ref[...] = h + b3_ref[...]


# ---------------------------------------------------------------------------
# Wrappers around pallas_call
# ---------------------------------------------------------------------------
def pallas_conv_relu_pool(x, w2, b2, *, k=5, tm_max=4096):
    """x: (C, H, W, N) bf16 (CHWN); w2: (OC, C*k*k) bf16; b2: (OC, 1) f32.
    Returns maxpool2x2(relu(conv_valid(x, w) + b)) as (OC, PH, PW, N) bf16."""
    C, H, W, N = x.shape
    OC, K = w2.shape
    assert K == C * k * k
    PH, PW = (H - k + 1) // 2, (W - k + 1) // 2
    M = PH * PW * N                          # pooled pixels (lane axis, n minor)
    TM, Mpad = _lane_tiling(M, tm_max)       # 4 taps x 2 bufs x K x TM << VMEM

    # One fused XLA gather-conv per pooling tap: tap (dh, dw) extracts the
    # (c, kh, kw)-ordered bf16 patches of the conv output positions
    # (2*ph+dh, 2*pw+dw), i.e. exactly the four members of each 2x2 window.
    # TODO(synk): implicit GEMM — build these taps inside the kernel instead.
    dn = ("CHWN", "OIHW", "CHWN")
    taps = []
    for dh in (0, 1):
        for dw in (0, 1):
            p = jax.lax.conv_general_dilated_patches(
                x[:, dh:, dw:, :], filter_shape=(k, k), window_strides=(2, 2),
                padding="VALID", dimension_numbers=dn)        # (K, PH, PW, N)
            p = p.reshape(K, M)
            taps.append(jnp.pad(p, ((0, 0), (0, Mpad - M))))

    flops = 2 * OC * K * Mpad * 4
    bytes_accessed = 4 * K * Mpad * 2 + OC * K * 2 + OC * 4 + OC * Mpad * 2
    out = pl.pallas_call(
        _conv_relu_pool_kernel,
        out_shape=jax.ShapeDtypeStruct((OC, Mpad), COMPUTE_DTYPE),
        grid=(Mpad // TM,),
        in_specs=[pl.BlockSpec((OC, K), lambda i: (0, 0)),
                  pl.BlockSpec((OC, 1), lambda i: (0, 0))]
                 + [pl.BlockSpec((K, TM), lambda i: (0, i))] * 4,
        out_specs=pl.BlockSpec((OC, TM), lambda i: (0, i)),
        compiler_params=pltpu.CompilerParams(
            dimension_semantics=("parallel",),   # pipeline + megacore split (v7x)
            vmem_limit_bytes=VMEM_LIMIT),
        cost_estimate=pl.CostEstimate(flops=flops, transcendentals=0,
                                      bytes_accessed=bytes_accessed),
    )(w2, b2, *taps)

    # (OC, M) -> (OC, PH, PW, N): pure reshape, no activation transpose.
    return out[:, :M].reshape(OC, PH, PW, N)


def pallas_mlp(xf, kp, *, tn_max=512):
    """xf: (400, N) bf16 feature-major -> logits (N, 10) f32 via one fused
    3-layer transposed-FC kernel (batch is the lane axis)."""
    F, N = xf.shape
    TN, Npad = _lane_tiling(N, tn_max)
    xp = jnp.pad(xf, ((0, 0), (0, Npad - N)))

    flops = 2 * Npad * (128 * F + 128 * 128 + 16 * 128)
    bytes_accessed = (F * Npad * 2 + (128 * F + 128 * 128 + 16 * 128) * 2
                      + (128 + 128 + 16) * 4 + 16 * Npad * 4)
    out = pl.pallas_call(
        _mlp_kernel,
        out_shape=jax.ShapeDtypeStruct((16, Npad), jnp.float32),
        grid=(Npad // TN,),
        in_specs=[pl.BlockSpec((F, TN), lambda i: (0, i)),
                  pl.BlockSpec((128, F), lambda i: (0, 0)),
                  pl.BlockSpec((128, 1), lambda i: (0, 0)),
                  pl.BlockSpec((128, 128), lambda i: (0, 0)),
                  pl.BlockSpec((128, 1), lambda i: (0, 0)),
                  pl.BlockSpec((16, 128), lambda i: (0, 0)),
                  pl.BlockSpec((16, 1), lambda i: (0, 0))],
        out_specs=pl.BlockSpec((16, TN), lambda i: (0, i)),
        compiler_params=pltpu.CompilerParams(
            dimension_semantics=("parallel",),
            vmem_limit_bytes=VMEM_LIMIT),
        cost_estimate=pl.CostEstimate(flops=flops, transcendentals=0,
                                      bytes_accessed=bytes_accessed),
    )(xp, kp["ftw1"], kp["ftb1"], kp["ftw2"], kp["ftb2"], kp["ftw3"], kp["ftb3"])
    return out[:10, :N].T                                  # tiny (10, N) permute


# ---------------------------------------------------------------------------
# Parameters (PyTorch-default-style init) + one-time kernel layout prep
# ---------------------------------------------------------------------------
def _uniform(key, shape, fan_in):
    bound = 1.0 / jnp.sqrt(jnp.float32(fan_in))
    return jax.random.uniform(key, shape, jnp.float32, -bound, bound)


def init_params(key):
    ks = jax.random.split(key, 10)
    p = {}
    p["w1"] = _uniform(ks[0], (6, 3, 5, 5), 3 * 5 * 5)
    p["b1"] = _uniform(ks[1], (6,), 3 * 5 * 5)
    p["w2"] = _uniform(ks[2], (16, 6, 5, 5), 6 * 5 * 5)
    p["b2"] = _uniform(ks[3], (16,), 6 * 5 * 5)
    p["fw1"] = _uniform(ks[4], (400, 120), 400)   # linear weights stored (in, out)
    p["fb1"] = _uniform(ks[5], (120,), 400)
    p["fw2"] = _uniform(ks[6], (120, 84), 120)
    p["fb2"] = _uniform(ks[7], (84,), 120)
    p["fw3"] = _uniform(ks[8], (84, 10), 84)
    p["fb3"] = _uniform(ks[9], (10,), 84)
    return p


def _pad2(w, rows, cols):
    return jnp.pad(w, ((0, rows - w.shape[0]), (0, cols - w.shape[1])))


def prepare_params(p):
    """One-time weight layout transforms, hoisted out of the forward pass."""
    kp = {}
    kp["cw1"] = p["w1"].reshape(6, 3 * 5 * 5).astype(COMPUTE_DTYPE)     # (OC, K)
    kp["cb1"] = p["b1"].reshape(6, 1).astype(jnp.float32)
    kp["cw2"] = p["w2"].reshape(16, 6 * 5 * 5).astype(COMPUTE_DTYPE)
    kp["cb2"] = p["b2"].reshape(16, 1).astype(jnp.float32)
    # Classifier weights transposed to (out, in) for the feature-major MLP;
    # zero-padded on out-dims only (no 400->512 padding of fc1's input dim).
    kp["ftw1"] = _pad2(p["fw1"].T, 128, 400).astype(COMPUTE_DTYPE)      # (128,400)
    kp["ftb1"] = _pad2(p["fb1"].reshape(-1, 1), 128, 1).astype(jnp.float32)
    kp["ftw2"] = _pad2(p["fw2"].T, 128, 128).astype(COMPUTE_DTYPE)
    kp["ftb2"] = _pad2(p["fb2"].reshape(-1, 1), 128, 1).astype(jnp.float32)
    kp["ftw3"] = _pad2(p["fw3"].T, 16, 128).astype(COMPUTE_DTYPE)
    kp["ftb3"] = _pad2(p["fb3"].reshape(-1, 1), 16, 1).astype(jnp.float32)
    return kp


# ---------------------------------------------------------------------------
# Forward pass (mirrors Net.forward) + pure-JAX reference
# ---------------------------------------------------------------------------
@jax.jit
def net_forward(x, kp):
    # One-time layout change: NCHW f32 -> CHWN bf16. Everything downstream
    # stays feature-major, so no per-layer activation transposes remain.
    xc = x.transpose(1, 2, 3, 0).astype(COMPUTE_DTYPE)    # (3, 32, 32, N)
    y = pallas_conv_relu_pool(xc, kp["cw1"], kp["cb1"])   # (6, 14, 14, N)
    y = pallas_conv_relu_pool(y, kp["cw2"], kp["cb2"])    # (16, 5, 5, N)
    y = y.reshape(16 * 5 * 5, -1)                         # (400, N): PyTorch's
    return pallas_mlp(y, kp)                              # view(-1,400) ordering


def ref_forward(x, p):
    def conv(v, w, b):
        y = jax.lax.conv_general_dilated(
            v, w, (1, 1), "VALID", dimension_numbers=("NCHW", "OIHW", "NCHW"))
        return y + b.reshape(1, -1, 1, 1)

    def pool(v):
        n, c, h, w = v.shape
        return v.reshape(n, c, h // 2, 2, w // 2, 2).max(axis=(3, 5))

    y = pool(jax.nn.relu(conv(x, p["w1"], p["b1"])))
    y = pool(jax.nn.relu(conv(y, p["w2"], p["b2"])))
    y = y.reshape(y.shape[0], -1)
    y = jax.nn.relu(y @ p["fw1"] + p["fb1"])
    y = jax.nn.relu(y @ p["fw2"] + p["fb2"])
    return y @ p["fw3"] + p["fb3"]


if __name__ == "__main__":
    key = jax.random.PRNGKey(0)
    k_x, k_p = jax.random.split(key)
    # Architecture implies 32x32 spatial input (16*5*5 = 400 flatten).
    x = jax.random.normal(k_x, (2, 3, 32, 32), jnp.float32)
    params = init_params(k_p)
    kparams = prepare_params(params)

    out = jax.block_until_ready(net_forward(x, kparams))
    assert out.shape == (2, 10) and out.dtype == jnp.float32

    ref = jax.block_until_ready(ref_forward(x, params))
    # bf16 matmul operands + bf16 intermediate activations -> scaled tolerance.
    tol = 4e-2 * (1.0 + float(jnp.max(jnp.abs(ref))))
    err = float(jnp.max(jnp.abs(out - ref)))
    assert err <= tol, f"mismatch vs reference: max|diff|={err:.4f} tol={tol:.4f}"
    print("KERNEL_OK")
</pallas_src>

<mosaic_0001>
module attributes {stable_mosaic.version = 11 : i64} {
  func.func @_conv_relu_pool_kernel(%arg0: i32, %arg1: memref<6x75xbf16, #tpu.memory_space<vmem>>, %arg2: memref<6x1xf32, #tpu.memory_space<vmem>>, %arg3: memref<75x256xbf16, #tpu.memory_space<vmem>>, %arg4: memref<75x256xbf16, #tpu.memory_space<vmem>>, %arg5: memref<75x256xbf16, #tpu.memory_space<vmem>>, %arg6: memref<75x256xbf16, #tpu.memory_space<vmem>>, %arg7: memref<6x256xbf16, #tpu.memory_space<vmem>>) attributes {dimension_semantics = [#tpu.dimension_semantics<parallel>], iteration_bounds = array<i64: 2>, scalar_prefetch = 0 : i64, scratch_operands = 0 : i64, tpu.core_type = #tpu.core_type<tc>, window_params = [{pipeline_mode = #tpu.pipeline_mode<synchronous>, transform_indices = @transform_0, window_bounds = array<i64: 6, 75>}, {pipeline_mode = #tpu.pipeline_mode<synchronous>, transform_indices = @transform_1, window_bounds = array<i64: 6, 1>}, {transform_indices = @transform_2, window_bounds = array<i64: 75, 256>}, {transform_indices = @transform_3, window_bounds = array<i64: 75, 256>}, {transform_indices = @transform_4, window_bounds = array<i64: 75, 256>}, {transform_indices = @transform_5, window_bounds = array<i64: 75, 256>}, {transform_indices = @transform_6, window_bounds = array<i64: 6, 256>}]} {
    %c0 = arith.constant 0 : index
    %c0_0 = arith.constant 0 : index
    %0 = vector.load %arg1[%c0, %c0_0] : memref<6x75xbf16, #tpu.memory_space<vmem>>, vector<6x75xbf16>
    %c0_1 = arith.constant 0 : index
    %c0_2 = arith.constant 0 : index
    %1 = vector.load %arg3[%c0_1, %c0_2] : memref<75x256xbf16, #tpu.memory_space<vmem>>, vector<75x256xbf16>
    %cst = arith.constant dense<0.000000e+00> : vector<6x256xf32>
    %2 = tpu.matmul %0, %1, %cst {dimension_numbers = #tpu.dot_dimension_numbers<[1], [0], [0], [1], [0, 0, 1, 1], [], []>} : vector<6x75xbf16>, vector<75x256xbf16>, vector<6x256xf32> -> vector<6x256xf32>
    %c0_3 = arith.constant 0 : index
    %c0_4 = arith.constant 0 : index
    %3 = vector.load %arg4[%c0_3, %c0_4] : memref<75x256xbf16, #tpu.memory_space<vmem>>, vector<75x256xbf16>
    %cst_5 = arith.constant dense<0.000000e+00> : vector<6x256xf32>
    %4 = tpu.matmul %0, %3, %cst_5 {dimension_numbers = #tpu.dot_dimension_numbers<[1], [0], [0], [1], [0, 0, 1, 1], [], []>} : vector<6x75xbf16>, vector<75x256xbf16>, vector<6x256xf32> -> vector<6x256xf32>
    %5 = arith.maximumf %2, %4 : vector<6x256xf32>
    %c0_6 = arith.constant 0 : index
    %c0_7 = arith.constant 0 : index
    %6 = vector.load %arg5[%c0_6, %c0_7] : memref<75x256xbf16, #tpu.memory_space<vmem>>, vector<75x256xbf16>
    %cst_8 = arith.constant dense<0.000000e+00> : vector<6x256xf32>
    %7 = tpu.matmul %0, %6, %cst_8 {dimension_numbers = #tpu.dot_dimension_numbers<[1], [0], [0], [1], [0, 0, 1, 1], [], []>} : vector<6x75xbf16>, vector<75x256xbf16>, vector<6x256xf32> -> vector<6x256xf32>
    %8 = arith.maximumf %5, %7 : vector<6x256xf32>
    %c0_9 = arith.constant 0 : index
    %c0_10 = arith.constant 0 : index
    %9 = vector.load %arg6[%c0_9, %c0_10] : memref<75x256xbf16, #tpu.memory_space<vmem>>, vector<75x256xbf16>
    %cst_11 = arith.constant dense<0.000000e+00> : vector<6x256xf32>
    %10 = tpu.matmul %0, %9, %cst_11 {dimension_numbers = #tpu.dot_dimension_numbers<[1], [0], [0], [1], [0, 0, 1, 1], [], []>} : vector<6x75xbf16>, vector<75x256xbf16>, vector<6x256xf32> -> vector<6x256xf32>
    %11 = arith.maximumf %8, %10 : vector<6x256xf32>
    %c0_12 = arith.constant 0 : index
    %c0_13 = arith.constant 0 : index
    %12 = vector.load %arg2[%c0_12, %c0_13] : memref<6x1xf32, #tpu.memory_space<vmem>>, vector<6x1xf32>
    %13 = vector.broadcast %12 : vector<6x1xf32> to vector<6x256xf32>
    %14 = arith.addf %11, %13 : vector<6x256xf32>
    %cst_14 = arith.constant 0.000000e+00 : f32
    %15 = vector.broadcast %cst_14 : f32 to vector<6x256xf32>
    %16 = arith.maximumf %14, %15 : vector<6x256xf32>
    %17 = arith.truncf %16 : vector<6x256xf32> to vector<6x256xbf16>
    %c0_15 = arith.constant 0 : index
    %c0_16 = arith.constant 0 : index
    %18 = vector.load %arg7[%c0_15, %c0_16] : memref<6x256xbf16, #tpu.memory_space<vmem>>, vector<6x256xbf16>
    tpu.vector_store %arg7[%c0_15, %c0_16], %17 {strides = array<i32>} : memref<6x256xbf16, #tpu.memory_space<vmem>>, vector<6x256xbf16>,
    return
  }
  func.func @transform_0(%arg0: i32) -> (i32, i32) {
    %c0_i32 = arith.constant 0 : i32
    %c0_i32_0 = arith.constant 0 : i32
    %c0_i32_1 = arith.constant 0 : i32
    return %c0_i32, %c0_i32_0 : i32, i32
  }
  func.func @transform_1(%arg0: i32) -> (i32, i32) {
    %c0_i32 = arith.constant 0 : i32
    %c0_i32_0 = arith.constant 0 : i32
    %c0_i32_1 = arith.constant 0 : i32
    return %c0_i32, %c0_i32_0 : i32, i32
  }
  func.func @transform_2(%arg0: i32) -> (i32, i32) {
    %c0_i32 = arith.constant 0 : i32
    %c0_i32_0 = arith.constant 0 : i32
    return %c0_i32, %arg0 : i32, i32
  }
  func.func @transform_3(%arg0: i32) -> (i32, i32) {
    %c0_i32 = arith.constant 0 : i32
    %c0_i32_0 = arith.constant 0 : i32
    return %c0_i32, %arg0 : i32, i32
  }
  func.func @transform_4(%arg0: i32) -> (i32, i32) {
    %c0_i32 = arith.constant 0 : i32
    %c0_i32_0 = arith.constant 0 : i32
    return %c0_i32, %arg0 : i32, i32
  }
  func.func @transform_5(%arg0: i32) -> (i32, i32) {
    %c0_i32 = arith.constant 0 : i32
    %c0_i32_0 = arith.constant 0 : i32
    return %c0_i32, %arg0 : i32, i32
  }
  func.func @transform_6(%arg0: i32) -> (i32, i32) {
    %c0_i32 = arith.constant 0 : i32
    %c0_i32_0 = arith.constant 0 : i32
    return %c0_i32, %arg0 : i32, i32
  }
}

module attributes {stable_mosaic.version = 11 : i64} {
  func.func @_conv_relu_pool_kernel(%arg0: i32, %arg1: memref<16x150xbf16, #tpu.memory_space<vmem>>, %arg2: memref<16x1xf32, #tpu.memory_space<vmem>>, %arg3: memref<150x128xbf16, #tpu.memory_space<vmem>>, %arg4: memref<150x128xbf16, #tpu.memory_space<vmem>>, %arg5: memref<150x128xbf16, #tpu.memory_space<vmem>>, %arg6: memref<150x128xbf16, #tpu.memory_space<vmem>>, %arg7: memref<16x128xbf16, #tpu.memory_space<vmem>>) attributes {dimension_semantics = [#tpu.dimension_semantics<parallel>], iteration_bounds = array<i64: 1>, scalar_prefetch = 0 : i64, scratch_operands = 0 : i64, tpu.core_type = #tpu.core_type<tc>, window_params = [{pipeline_mode = #tpu.pipeline_mode<synchronous>, transform_indices = @transform_0, window_bounds = array<i64: 16, 150>}, {pipeline_mode = #tpu.pipeline_mode<synchronous>, transform_indices = @transform_1, window_bounds = array<i64: 16, 1>}, {transform_indices = @transform_2, window_bounds = array<i64: 150, 128>}, {transform_indices = @transform_3, window_bounds = array<i64: 150, 128>}, {transform_indices = @transform_4, window_bounds = array<i64: 150, 128>}, {transform_indices = @transform_5, window_bounds = array<i64: 150, 128>}, {transform_indices = @transform_6, window_bounds = array<i64: 16, 128>}]} {
    %c0 = arith.constant 0 : index
    %c0_0 = arith.constant 0 : index
    %0 = vector.load %arg1[%c0, %c0_0] : memref<16x150xbf16, #tpu.memory_space<vmem>>, vector<16x150xbf16>
    %c0_1 = arith.constant 0 : index
    %c0_2 = arith.constant 0 : index
    %1 = vector.load %arg3[%c0_1, %c0_2] : memref<150x128xbf16, #tpu.memory_space<vmem>>, vector<150x128xbf16>
    %cst = arith.constant dense<0.000000e+00> : vector<16x128xf32>
    %2 = tpu.matmul %0, %1, %cst {dimension_numbers = #tpu.dot_dimension_numbers<[1], [0], [0], [1], [0, 0, 1, 1], [], []>} : vector<16x150xbf16>, vector<150x128xbf16>, vector<16x128xf32> -> vector<16x128xf32>
    %c0_3 = arith.constant 0 : index
    %c0_4 = arith.constant 0 : index
    %3 = vector.load %arg4[%c0_3, %c0_4] : memref<150x128xbf16, #tpu.memory_space<vmem>>, vector<150x128xbf16>
    %cst_5 = arith.constant dense<0.000000e+00> : vector<16x128xf32>
    %4 = tpu.matmul %0, %3, %cst_5 {dimension_numbers = #tpu.dot_dimension_numbers<[1], [0], [0], [1], [0, 0, 1, 1], [], []>} : vector<16x150xbf16>, vector<150x128xbf16>, vector<16x128xf32> -> vector<16x128xf32>
    %5 = arith.maximumf %2, %4 : vector<16x128xf32>
    %c0_6 = arith.constant 0 : index
    %c0_7 = arith.constant 0 : index
    %6 = vector.load %arg5[%c0_6, %c0_7] : memref<150x128xbf16, #tpu.memory_space<vmem>>, vector<150x128xbf16>
    %cst_8 = arith.constant dense<0.000000e+00> : vector<16x128xf32>
    %7 = tpu.matmul %0, %6, %cst_8 {dimension_numbers = #tpu.dot_dimension_numbers<[1], [0], [0], [1], [0, 0, 1, 1], [], []>} : vector<16x150xbf16>, vector<150x128xbf16>, vector<16x128xf32> -> vector<16x128xf32>
    %8 = arith.maximumf %5, %7 : vector<16x128xf32>
    %c0_9 = arith.constant 0 : index
    %c0_10 = arith.constant 0 : index
    %9 = vector.load %arg6[%c0_9, %c0_10] : memref<150x128xbf16, #tpu.memory_space<vmem>>, vector<150x128xbf16>
    %cst_11 = arith.constant dense<0.000000e+00> : vector<16x128xf32>
    %10 = tpu.matmul %0, %9, %cst_11 {dimension_numbers = #tpu.dot_dimension_numbers<[1], [0], [0], [1], [0, 0, 1, 1], [], []>} : vector<16x150xbf16>, vector<150x128xbf16>, vector<16x128xf32> -> vector<16x128xf32>
    %11 = arith.maximumf %8, %10 : vector<16x128xf32>
    %c0_12 = arith.constant 0 : index
    %c0_13 = arith.constant 0 : index
    %12 = vector.load %arg2[%c0_12, %c0_13] : memref<16x1xf32, #tpu.memory_space<vmem>>, vector<16x1xf32>
    %13 = vector.broadcast %12 : vector<16x1xf32> to vector<16x128xf32>
    %14 = arith.addf %11, %13 : vector<16x128xf32>
    %cst_14 = arith.constant 0.000000e+00 : f32
    %15 = vector.broadcast %cst_14 : f32 to vector<16x128xf32>
    %16 = arith.maximumf %14, %15 : vector<16x128xf32>
    %17 = arith.truncf %16 : vector<16x128xf32> to vector<16x128xbf16>
    %c0_15 = arith.constant 0 : index
    %c0_16 = arith.constant 0 : index
    %18 = vector.load %arg7[%c0_15, %c0_16] : memref<16x128xbf16, #tpu.memory_space<vmem>>, vector<16x128xbf16>
    tpu.vector_store %arg7[%c0_15, %c0_16], %17 {strides = array<i32>} : memref<16x128xbf16, #tpu.memory_space<vmem>>, vector<16x128xbf16>,
    return
  }
  func.func @transform_0(%arg0: i32) -> (i32, i32) {
    %c0_i32 = arith.constant 0 : i32
    %c0_i32_0 = arith.constant 0 : i32
    %c0_i32_1 = arith.constant 0 : i32
    return %c0_i32, %c0_i32_0 : i32, i32
  }
  func.func @transform_1(%arg0: i32) -> (i32, i32) {
    %c0_i32 = arith.constant 0 : i32
    %c0_i32_0 = arith.constant 0 : i32
    %c0_i32_1 = arith.constant 0 : i32
    return %c0_i32, %c0_i32_0 : i32, i32
  }
  func.func @transform_2(%arg0: i32) -> (i32, i32) {
    %c0_i32 = arith.constant 0 : i32
    %c0_i32_0 = arith.constant 0 : i32
    return %c0_i32, %arg0 : i32, i32
  }
  func.func @transform_3(%arg0: i32) -> (i32, i32) {
    %c0_i32 = arith.constant 0 : i32
    %c0_i32_0 = arith.constant 0 : i32
    return %c0_i32, %arg0 : i32, i32
  }
  func.func @transform_4(%arg0: i32) -> (i32, i32) {
    %c0_i32 = arith.constant 0 : i32
    %c0_i32_0 = arith.constant 0 : i32
    return %c0_i32, %arg0 : i32, i32
  }
  func.func @transform_5(%arg0: i32) -> (i32, i32) {
    %c0_i32 = arith.constant 0 : i32
    %c0_i32_0 = arith.constant 0 : i32
    return %c0_i32, %arg0 : i32, i32
  }
  func.func @transform_6(%arg0: i32) -> (i32, i32) {
    %c0_i32 = arith.constant 0 : i32
    %c0_i32_0 = arith.constant 0 : i32
    return %c0_i32, %arg0 : i32, i32
  }
}

module attributes {stable_mosaic.version = 11 : i64} {
  func.func @_mlp_kernel(%arg0: i32, %arg1: memref<400x128xbf16, #tpu.memory_space<vmem>>, %arg2: memref<128x400xbf16, #tpu.memory_space<vmem>>, %arg3: memref<128x1xf32, #tpu.memory_space<vmem>>, %arg4: memref<128x128xbf16, #tpu.memory_space<vmem>>, %arg5: memref<128x1xf32, #tpu.memory_space<vmem>>, %arg6: memref<16x128xbf16, #tpu.memory_space<vmem>>, %arg7: memref<16x1xf32, #tpu.memory_space<vmem>>, %arg8: memref<16x128xf32, #tpu.memory_space<vmem>>) attributes {dimension_semantics = [#tpu.dimension_semantics<parallel>], iteration_bounds = array<i64: 1>, scalar_prefetch = 0 : i64, scratch_operands = 0 : i64, tpu.core_type = #tpu.core_type<tc>, window_params = [{transform_indices = @transform_0, window_bounds = array<i64: 400, 128>}, {pipeline_mode = #tpu.pipeline_mode<synchronous>, transform_indices = @transform_1, window_bounds = array<i64: 128, 400>}, {pipeline_mode = #tpu.pipeline_mode<synchronous>, transform_indices = @transform_2, window_bounds = array<i64: 128, 1>}, {pipeline_mode = #tpu.pipeline_mode<synchronous>, transform_indices = @transform_3, window_bounds = array<i64: 128, 128>}, {pipeline_mode = #tpu.pipeline_mode<synchronous>, transform_indices = @transform_4, window_bounds = array<i64: 128, 1>}, {pipeline_mode = #tpu.pipeline_mode<synchronous>, transform_indices = @transform_5, window_bounds = array<i64: 16, 128>}, {pipeline_mode = #tpu.pipeline_mode<synchronous>, transform_indices = @transform_6, window_bounds = array<i64: 16, 1>}, {transform_indices = @transform_7, window_bounds = array<i64: 16, 128>}]} {
    %c0 = arith.constant 0 : index
    %c0_0 = arith.constant 0 : index
    %0 = vector.load %arg2[%c0, %c0_0] : memref<128x400xbf16, #tpu.memory_space<vmem>>, vector<128x400xbf16>
    %c0_1 = arith.constant 0 : index
    %c0_2 = arith.constant 0 : index
    %1 = vector.load %arg1[%c0_1, %c0_2] : memref<400x128xbf16, #tpu.memory_space<vmem>>, vector<400x128xbf16>
    %cst = arith.constant dense<0.000000e+00> : vector<128x128xf32>
    %2 = tpu.matmul %0, %1, %cst {dimension_numbers = #tpu.dot_dimension_numbers<[1], [0], [0], [1], [0, 0, 1, 1], [], []>} : vector<128x400xbf16>, vector<400x128xbf16>, vector<128x128xf32> -> vector<128x128xf32>
    %c0_3 = arith.constant 0 : index
    %c0_4 = arith.constant 0 : index
    %3 = vector.load %arg3[%c0_3, %c0_4] : memref<128x1xf32, #tpu.memory_space<vmem>>, vector<128x1xf32>
    %4 = vector.broadcast %3 : vector<128x1xf32> to vector<128x128xf32>
    %5 = arith.addf %2, %4 : vector<128x128xf32>
    %cst_5 = arith.constant 0.000000e+00 : f32
    %6 = vector.broadcast %cst_5 : f32 to vector<128x128xf32>
    %7 = arith.maximumf %5, %6 : vector<128x128xf32>
    %c0_6 = arith.constant 0 : index
    %c0_7 = arith.constant 0 : index
    %8 = vector.load %arg4[%c0_6, %c0_7] : memref<128x128xbf16, #tpu.memory_space<vmem>>, vector<128x128xbf16>
    %9 = arith.truncf %7 : vector<128x128xf32> to vector<128x128xbf16>
    %cst_8 = arith.constant dense<0.000000e+00> : vector<128x128xf32>
    %10 = tpu.matmul %8, %9, %cst_8 {dimension_numbers = #tpu.dot_dimension_numbers<[1], [0], [0], [1], [0, 0, 1, 1], [], []>} : vector<128x128xbf16>, vector<128x128xbf16>, vector<128x128xf32> -> vector<128x128xf32>
    %c0_9 = arith.constant 0 : index
    %c0_10 = arith.constant 0 : index
    %11 = vector.load %arg5[%c0_9, %c0_10] : memref<128x1xf32, #tpu.memory_space<vmem>>, vector<128x1xf32>
    %12 = vector.broadcast %11 : vector<128x1xf32> to vector<128x128xf32>
    %13 = arith.addf %10, %12 : vector<128x128xf32>
    %cst_11 = arith.constant 0.000000e+00 : f32
    %14 = vector.broadcast %cst_11 : f32 to vector<128x128xf32>
    %15 = arith.maximumf %13, %14 : vector<128x128xf32>
    %c0_12 = arith.constant 0 : index
    %c0_13 = arith.constant 0 : index
    %16 = vector.load %arg6[%c0_12, %c0_13] : memref<16x128xbf16, #tpu.memory_space<vmem>>, vector<16x128xbf16>
    %17 = arith.truncf %15 : vector<128x128xf32> to vector<128x128xbf16>
    %cst_14 = arith.constant dense<0.000000e+00> : vector<16x128xf32>
    %18 = tpu.matmul %16, %17, %cst_14 {dimension_numbers = #tpu.dot_dimension_numbers<[1], [0], [0], [1], [0, 0, 1, 1], [], []>} : vector<16x128xbf16>, vector<128x128xbf16>, vector<16x128xf32> -> vector<16x128xf32>
    %c0_15 = arith.constant 0 : index
    %c0_16 = arith.constant 0 : index
    %19 = vector.load %arg7[%c0_15, %c0_16] : memref<16x1xf32, #tpu.memory_space<vmem>>, vector<16x1xf32>
    %20 = vector.broadcast %19 : vector<16x1xf32> to vector<16x128xf32>
    %21 = arith.addf %18, %20 : vector<16x128xf32>
    %c0_17 = arith.constant 0 : index
    %c0_18 = arith.constant 0 : index
    %22 = vector.load %arg8[%c0_17, %c0_18] : memref<16x128xf32, #tpu.memory_space<vmem>>, vector<16x128xf32>
    tpu.vector_store %arg8[%c0_17, %c0_18], %21 {strides = array<i32>} : memref<16x128xf32, #tpu.memory_space<vmem>>, vector<16x128xf32>,
    return
  }
  func.func @transform_0(%arg0: i32) -> (i32, i32) {
    %c0_i32 = arith.constant 0 : i32
    %c0_i32_0 = arith.constant 0 : i32
    return %c0_i32, %arg0 : i32, i32
  }
  func.func @transform_1(%arg0: i32) -> (i32, i32) {
    %c0_i32 = arith.constant 0 : i32
    %c0_i32_0 = arith.constant 0 : i32
    %c0_i32_1 = arith.constant 0 : i32
    return %c0_i32, %c0_i32_0 : i32, i32
  }
  func.func @transform_2(%arg0: i32) -> (i32, i32) {
    %c0_i32 = arith.constant 0 : i32
    %c0_i32_0 = arith.constant 0 : i32
    %c0_i32_1 = arith.constant 0 : i32
    return %c0_i32, %c0_i32_0 : i32, i32
  }
  func.func @transform_3(%arg0: i32) -> (i32, i32) {
    %c0_i32 = arith.constant 0 : i32
    %c0_i32_0 = arith.constant 0 : i32
    %c0_i32_1 = arith.constant 0 : i32
    return %c0_i32, %c0_i32_0 : i32, i32
  }
  func.func @transform_4(%arg0: i32) -> (i32, i32) {
    %c0_i32 = arith.constant 0 : i32
    %c0_i32_0 = arith.constant 0 : i32
    %c0_i32_1 = arith.constant 0 : i32
    return %c0_i32, %c0_i32_0 : i32, i32
  }
  func.func @transform_5(%arg0: i32) -> (i32, i32) {
    %c0_i32 = arith.constant 0 : i32
    %c0_i32_0 = arith.constant 0 : i32
    %c0_i32_1 = arith.constant 0 : i32
    return %c0_i32, %c0_i32_0 : i32, i32
  }
  func.func @transform_6(%arg0: i32) -> (i32, i32) {
    %c0_i32 = arith.constant 0 : i32
    %c0_i32_0 = arith.constant 0 : i32
    %c0_i32_1 = arith.constant 0 : i32
    return %c0_i32, %c0_i32_0 : i32, i32
  }
  func.func @transform_7(%arg0: i32) -> (i32, i32) {
    %c0_i32 = arith.constant 0 : i32
    %c0_i32_0 = arith.constant 0 : i32
    return %c0_i32, %arg0 : i32, i32
  }
}

</mosaic_0001>

<llo_original>
// kernel: net_forward.3
$region0: #{net_forward.3}
  #allocation0 [shape = 'u32[]', space=smem, size = 0x4, offset = 0x4, fixed_abs, tag = 'smem constant byte address 0x4 - core index']
  #allocation1 [shape = 'u32[144,128]{1,0:T(1,128)}', space=vmem, size = 0x12000, scoped, tag = 'internal scratch']
  %s0 = inlined_call_operand.vmem [shape: bf16[6,75], index: 0, kind: input, shape index: {}]
  %s1 = inlined_call_operand.vmem [shape: f32[6,1], index: 1, kind: input, shape index: {}]
  %s2 = inlined_call_operand.vmem [shape: bf16[75,512], index: 2, kind: input, shape index: {}]
  %s3 = inlined_call_operand.vmem [shape: bf16[75,512], index: 3, kind: input, shape index: {}]
  %s4 = inlined_call_operand.vmem [shape: bf16[75,512], index: 4, kind: input, shape index: {}]
  %s5 = inlined_call_operand.vmem [shape: bf16[75,512], index: 5, kind: input, shape index: {}]
  %s6 = inlined_call_operand.vmem [shape: bf16[6,512], index: 6, kind: output, shape index: {}]
  %s7 = sld [smem:[#allocation0]]
  $region209: #{net_forward.3} parent=0
    _
  %s9 = ssub.s32 1, %s7
  %s10 = scalar_select 0, %s9, %s7
  $region1: #{net_forward.3} parent=0
    #allocation2 [shape = 'u8[81920]{0}', space=vmem, size = 0x14000, scoped, tag = 'input window, operand 2']
    #allocation3 [shape = 'u8[81920]{0}', space=vmem, size = 0x14000, scoped, tag = 'input window, operand 3']
    #allocation4 [shape = 'u8[81920]{0}', space=vmem, size = 0x14000, scoped, tag = 'input window, operand 4']
    #allocation5 [shape = 'u8[81920]{0}', space=vmem, size = 0x14000, scoped, tag = 'input window, operand 5']
    loop: start=0, step=1, limit=4
    $region2: #{net_forward.3} parent=1 // loop_pre_header
      _
    $region3: #{net_forward.3} parent=1 // loop_header
      %s12 = sphi 0, %s16
      %p13 = scmp.ge.s32.totalorder %s12, 4
      %s20 = sphi 0, %s20
      %s22 = sphi 0, %s20
      %s23 = sphi 0, %s22
      %s37 = sphi 0, %s23
      %s41 = sphi 0, %s41
      %s43 = sphi 0, %s41
      %s44 = sphi 0, %s43
      %s58 = sphi 0, %s44
      %s64 = sphi 0, %s66
      %s67 = sphi 0, %s64
      %s68 = sphi 0, %s67
      %s84 = sphi 0, %s68
      %s90 = sphi 0, %s92
      %s93 = sphi 0, %s90
      %s94 = sphi 0, %s93
      %s110 = sphi 0, %s94
      %s116 = sphi 0, %s118
      %s119 = sphi 0, %s116
      %s120 = sphi 0, %s119
      %s136 = sphi 0, %s120
      %s142 = sphi 0, %s144
      %s145 = sphi 0, %s142
      %s146 = sphi 0, %s145
      %s162 = sphi 0, %s146
      %s168 = sphi 0, %s170
      %s171 = sphi 0, %s168
      %s172 = sphi 0, %s171
      %s188 = sphi 0, %s172
    $region4: #{net_forward.3} parent=1 // loop_header_branch
      %15 = sbr.rel (%p13) target = $region8
    $region5: #{net_forward.3} parent=1 // loop_body
      %s17 = ssub.s32 %s12, 1
      %s18 = ssub.s32 %s12, 2
      %s19 = sadd.s32 %s12, 1
      %s21 = sadd.s32 %s20, 1
      %p24 = scmp.eq.s32.totalorder %s12, 1
      %p25 = scmp.ne.s32.totalorder %s20, %s22
      %p26 = scmp.eq.s32.totalorder %s12, 0
      %p27 = por %p25, %p26
      %p28 = scmp.ne.s32.totalorder %s20, %s22
      %p29 = scmp.eq.s32.totalorder %s17, 1
      %p30 = por %p28, %p29
      %p31 = scmp.ne.s32.totalorder %s22, %s23
      %p32 = scmp.eq.s32.totalorder %s17, 0
      %p33 = por %p31, %p32
      %p34 = scmp.ne.s32.totalorder %s22, %s23
      %p35 = scmp.eq.s32.totalorder %s18, 1
      %p36 = por %p34, %p35
      %p38 = scmp.ne.s32.totalorder %s23, %s37
      %p39 = scmp.eq.s32.totalorder %s18, 0
      %p40 = por %p38, %p39
      %s42 = sadd.s32 %s41, 1
      %p45 = scmp.eq.s32.totalorder %s12, 1
      %p46 = scmp.ne.s32.totalorder %s41, %s43
      %p47 = scmp.eq.s32.totalorder %s12, 0
      %p48 = por %p46, %p47
      %p49 = scmp.ne.s32.totalorder %s41, %s43
      %p50 = scmp.eq.s32.totalorder %s17, 1
      %p51 = por %p49, %p50
      %p52 = scmp.ne.s32.totalorder %s43, %s44
      %p53 = scmp.eq.s32.totalorder %s17, 0
      %p54 = por %p52, %p53
      %p55 = scmp.ne.s32.totalorder %s43, %s44
      %p56 = scmp.eq.s32.totalorder %s18, 1
      %p57 = por %p55, %p56
      %p59 = scmp.ne.s32.totalorder %s44, %s58
      %p60 = scmp.eq.s32.totalorder %s18, 0
      %p61 = por %p59, %p60
      %s62 = ssub.s32 %s12, %s19
      %p63 = scmp.eq.s32.totalorder %s62, 0
      %s65 = sadd.s32 %s64, 1
      %s66 = scalar_select %p63, %s64, %s65
      %p69 = pneg %p63
      %p70 = scmp.eq.s32.totalorder %s12, 1
      %p71 = por %p69, %p70
      %p72 = scmp.ne.s32.totalorder %s64, %s67
      %p73 = scmp.eq.s32.totalorder %s12, 0
      %p74 = por %p72, %p73
      %p75 = scmp.ne.s32.totalorder %s64, %s67
      %p76 = scmp.eq.s32.totalorder %s17, 1
      %p77 = por %p75, %p76
      %p78 = scmp.ne.s32.totalorder %s67, %s68
      %p79 = scmp.eq.s32.totalorder %s17, 0
      %p80 = por %p78, %p79
      %p81 = scmp.ne.s32.totalorder %s67, %s68
      %p82 = scmp.eq.s32.totalorder %s18, 1
      %p83 = por %p81, %p82
      %p85 = scmp.ne.s32.totalorder %s68, %s84
      %p86 = scmp.eq.s32.totalorder %s18, 0
      %p87 = por %p85, %p86
      %s88 = ssub.s32 %s12, %s19
      %p89 = scmp.eq.s32.totalorder %s88, 0
      %s91 = sadd.s32 %s90, 1
      %s92 = scalar_select %p89, %s90, %s91
      %p95 = pneg %p89
      %p96 = scmp.eq.s32.totalorder %s12, 1
      %p97 = por %p95, %p96
      %p98 = scmp.ne.s32.totalorder %s90, %s93
      %p99 = scmp.eq.s32.totalorder %s12, 0
      %p100 = por %p98, %p99
      %p101 = scmp.ne.s32.totalorder %s90, %s93
      %p102 = scmp.eq.s32.totalorder %s17, 1
      %p103 = por %p101, %p102
      %p104 = scmp.ne.s32.totalorder %s93, %s94
      %p105 = scmp.eq.s32.totalorder %s17, 0
      %p106 = por %p104, %p105
      %p107 = scmp.ne.s32.totalorder %s93, %s94
      %p108 = scmp.eq.s32.totalorder %s18, 1
      %p109 = por %p107, %p108
      %p111 = scmp.ne.s32.totalorder %s94, %s110
      %p112 = scmp.eq.s32.totalorder %s18, 0
      %p113 = por %p111, %p112
      %s114 = ssub.s32 %s12, %s19
      %p115 = scmp.eq.s32.totalorder %s114, 0
      %s117 = sadd.s32 %s116, 1
      %s118 = scalar_select %p115, %s116, %s117
      %p121 = pneg %p115
      %p122 = scmp.eq.s32.totalorder %s12, 1
      %p123 = por %p121, %p122
      %p124 = scmp.ne.s32.totalorder %s116, %s119
      %p125 = scmp.eq.s32.totalorder %s12, 0
      %p126 = por %p124, %p125
      %p127 = scmp.ne.s32.totalorder %s116, %s119
      %p128 = scmp.eq.s32.totalorder %s17, 1
      %p129 = por %p127, %p128
      %p130 = scmp.ne.s32.totalorder %s119, %s120
      %p131 = scmp.eq.s32.totalorder %s17, 0
      %p132 = por %p130, %p131
      %p133 = scmp.ne.s32.totalorder %s119, %s120
      %p134 = scmp.eq.s32.totalorder %s18, 1
      %p135 = por %p133, %p134
      %p137 = scmp.ne.s32.totalorder %s120, %s136
      %p138 = scmp.eq.s32.totalorder %s18, 0
      %p139 = por %p137, %p138
      %s140 = ssub.s32 %s12, %s19
      %p141 = scmp.eq.s32.totalorder %s140, 0
      %s143 = sadd.s32 %s142, 1
      %s144 = scalar_select %p141, %s142, %s143
      %p147 = pneg %p141
      %p148 = scmp.eq.s32.totalorder %s12, 1
      %p149 = por %p147, %p148
      %p150 = scmp.ne.s32.totalorder %s142, %s145
      %p151 = scmp.eq.s32.totalorder %s12, 0
      %p152 = por %p150, %p151
      %p153 = scmp.ne.s32.totalorder %s142, %s145
      %p154 = scmp.eq.s32.totalorder %s17, 1
      %p155 = por %p153, %p154
      %p156 = scmp.ne.s32.totalorder %s145, %s146
      %p157 = scmp.eq.s32.totalorder %s17, 0
      %p158 = por %p156, %p157
      %p159 = scmp.ne.s32.totalorder %s145, %s146
      %p160 = scmp.eq.s32.totalorder %s18, 1
      %p161 = por %p159, %p160
      %p163 = scmp.ne.s32.totalorder %s146, %s162
      %p164 = scmp.eq.s32.totalorder %s18, 0
      %p165 = por %p163, %p164
      %s166 = ssub.s32 %s12, %s19
      %p167 = scmp.eq.s32.totalorder %s166, 0
      %s169 = sadd.s32 %s168, 1
      %s170 = scalar_select %p167, %s168, %s169
      %p173 = pneg %p167
      %p174 = scmp.eq.s32.totalorder %s12, 1
      %p175 = por %p173, %p174
      %p176 = scmp.ne.s32.totalorder %s168, %s171
      %p177 = scmp.eq.s32.totalorder %s12, 0
      %p178 = por %p176, %p177
      %p179 = scmp.ne.s32.totalorder %s168, %s171
      %p180 = scmp.eq.s32.totalorder %s17, 1
      %p181 = por %p179, %p180
      %p182 = scmp.ne.s32.totalorder %s171, %s172
      %p183 = scmp.eq.s32.totalorder %s17, 0
      %p184 = por %p182, %p183
      %p185 = scmp.ne.s32.totalorder %s171, %s172
      %p186 = scmp.eq.s32.totalorder %s18, 1
      %p187 = por %p185, %p186
      %p189 = scmp.ne.s32.totalorder %s172, %s188
      %p190 = scmp.eq.s32.totalorder %s18, 0
      %p191 = por %p189, %p190
      %p192 = scmp.le.s32.totalorder 1, %s12
      %p193 = scmp.lt.s32.totalorder %s12, 3
      %p194 = pnand %p192, %p193
      %p195 = pneg %p194
      // Predicated region
      $region9: #{net_forward.3} parent=5 // pred_check
        _
      $region10: #{net_forward.3} parent=5 // pred_check_branch
        %197 = sbr.rel (%p194) target = $region12
      $region11: #{net_forward.3} parent=5 // pred_region
        %s198 = ssub.s32 %s12, 1
        // Predicated region
        $region13: #{net_forward.3} parent=11 // pred_check
          %p199 = pneg %p33
        $region14: #{net_forward.3} parent=11 // pred_check_branch
          %201 = sbr.rel (%p199) target = $region16
        $region15: #{net_forward.3} parent=11 // pred_region
          _
        $region16: #{net_forward.3} parent=11 // pred_fallthru
          _
        // Predicated region
        $region17: #{net_forward.3} parent=11 // pred_check
          %p202 = pneg %p54
        $region18: #{net_forward.3} parent=11 // pred_check_branch
          %204 = sbr.rel (%p202) target = $region20
        $region19: #{net_forward.3} parent=11 // pred_region
          _
        $region20: #{net_forward.3} parent=11 // pred_fallthru
          _
      $region12: #{net_forward.3} parent=5 // pred_fallthru
        _
      %p205 = scmp.lt.s32.totalorder %s12, 2
      // Predicated region
      $region21: #{net_forward.3} parent=5 // pred_check
        %p206 = pneg %p205
      $region22: #{net_forward.3} parent=5 // pred_check_branch
        %208 = sbr.rel (%p206) target = $region24
      $region23: #{net_forward.3} parent=5 // pred_region
        // Predicated region
        $region25: #{net_forward.3} parent=23 // pred_check
          %p209 = pneg %p74
        $region26: #{net_forward.3} parent=23 // pred_check_branch
          %211 = sbr.rel (%p209) target = $region28
        $region27: #{net_forward.3} parent=23 // pred_region
          %s212 = sand.u32 %s64, 1
          %s213 = sand.u32 %s64, 1
          %s214 = smul.addr %s213, 80
          %s215 = scalar_lea.vmem [#allocation2], %s214
          %s216 = smul.u32 2, %s12
          %s217 = smul.addr %s216, 4
          %s218 = scalar_lea.vmem %s2, %s217
          // Predicated region
          $region29: #{net_forward.3} parent=27 // pred_check
            _
          $region30: #{net_forward.3} parent=27 // pred_check_branch
            %220 = sbr.rel (0) target = $region32
          $region31: #{net_forward.3} parent=27 // pred_region
            // Predicated region
            $region33: #{net_forward.3} parent=31 // pred_check
              _
            $region34: #{net_forward.3} parent=31 // pred_check_branch
              %222 = sbr.rel (0) target = $region36
            $region35: #{net_forward.3} parent=31 // pred_region
              // Predicated region
              $region48: #{net_forward.3} parent=35 // pred_check
                _
              $region49: #{net_forward.3} parent=35 // pred_check_branch
                %255 = sbr.rel (0) target = $region51
              $region50: #{net_forward.3} parent=35 // pred_region
                loop: start=0, step=1, limit=1
                $region52: #{net_forward.3} parent=50 // loop_pre_header
                  _
                $region53: #{net_forward.3} parent=50 // loop_header
                  %s257 = sphi 0, %s261
                  %p258 = scmp.ge.s32.totalorder %s257, 1
                  %s262 = sphi %s218, %s218
                  %s263 = sphi %s215, %s215
                $region54: #{net_forward.3} parent=50 // loop_header_branch
                  %260 = sbr.rel (%p258) target = $region58
                $region55: #{net_forward.3} parent=50 // loop_body
                  %v264 = vld [vmem:[%s262] sm:$0xff]
                  %265 = vst [vmem:[%s263] sm:$0xff] %v264
                  %v266 = vld [vmem:[%s262 + $0x10] sm:$0xff]
                  %267 = vst [vmem:[%s263 + $0x8] sm:$0xff] %v266
                  %v268 = vld [vmem:[%s262 + $0x20] sm:$0xff]
                  %269 = vst [vmem:[%s263 + $0x10] sm:$0xff] %v268
                  %v270 = vld [vmem:[%s262 + $0x30] sm:$0xff]
                  %271 = vst [vmem:[%s263 + $0x18] sm:$0xff] %v270
                  %v272 = vld [vmem:[%s262 + $0x40] sm:$0xff]
                  %273 = vst [vmem:[%s263 + $0x20] sm:$0xff] %v272
                  %v274 = vld [vmem:[%s262 + $0x50] sm:$0xff]
                  %275 = vst [vmem:[%s263 + $0x28] sm:$0xff] %v274
                  %v276 = vld [vmem:[%s262 + $0x60] sm:$0xff]
                  %277 = vst [vmem:[%s263 + $0x30] sm:$0xff] %v276
                  %v278 = vld [vmem:[%s262 + $0x70] sm:$0xff]
                  %279 = vst [vmem:[%s263 + $0x38] sm:$0xff] %v278
                  %v280 = vld [vmem:[%s262 + $0x80] sm:$0xff]
                  %281 = vst [vmem:[%s263 + $0x40] sm:$0xff] %v280
                  %v282 = vld [vmem:[%s262 + $0x90] sm:$0xff]
                  %283 = vst [vmem:[%s263 + $0x48] sm:$0xff] %v282
                $region56: #{net_forward.3} parent=50 // loop_footer
                  %s261 = sadd.s32 1, %s257
                $region57: #{net_forward.3} parent=50 // loop_footer_branch
                  %256 = sbr.rel target = $region53
                $region58: #{net_forward.3} parent=50 // loop_exit
                  _
              $region51: #{net_forward.3} parent=35 // pred_fallthru
                _
              // Predicated region
              $region59: #{net_forward.3} parent=35 // pred_check
                _
              $region60: #{net_forward.3} parent=35 // pred_check_branch
                %285 = sbr.rel target = $region62
              $region61: #{net_forward.3} parent=35 // pred_region
                _
              $region62: #{net_forward.3} parent=35 // pred_fallthru
                _
            $region36: #{net_forward.3} parent=31 // pred_fallthru
              _
            // Predicated region
            $region37: #{net_forward.3} parent=31 // pred_check
              _
            $region38: #{net_forward.3} parent=31 // pred_check_branch
              %224 = sbr.rel target = $region40
            $region39: #{net_forward.3} parent=31 // pred_region
              loop: start=0, step=1, limit=1
              $region41: #{net_forward.3} parent=39 // loop_pre_header
                _
              $region42: #{net_forward.3} parent=39 // loop_header
                %s227 = sphi 0, %s231
                %p228 = scmp.ge.s32.totalorder %s227, 1
                %s232 = sphi %s218, %s218
                %s233 = sphi %s215, %s215
              $region43: #{net_forward.3} parent=39 // loop_header_branch
                %230 = sbr.rel (%p228) target = $region47
              $region44: #{net_forward.3} parent=39 // loop_body
                %v234 = vld [vmem:[%s232] sm:$0xff]
                %235 = vst [vmem:[%s233] sm:$0xff] %v234
                %v236 = vld [vmem:[%s232 + $0x10] sm:$0xff]
                %237 = vst [vmem:[%s233 + $0x8] sm:$0xff] %v236
                %v238 = vld [vmem:[%s232 + $0x20] sm:$0xff]
                %239 = vst [vmem:[%s233 + $0x10] sm:$0xff] %v238
                %v240 = vld [vmem:[%s232 + $0x30] sm:$0xff]
                %241 = vst [vmem:[%s233 + $0x18] sm:$0xff] %v240
                %v242 = vld [vmem:[%s232 + $0x40] sm:$0xff]
                %243 = vst [vmem:[%s233 + $0x20] sm:$0xff] %v242
                %v244 = vld [vmem:[%s232 + $0x50] sm:$0xff]
                %245 = vst [vmem:[%s233 + $0x28] sm:$0xff] %v244
                %v246 = vld [vmem:[%s232 + $0x60] sm:$0xff]
                %247 = vst [vmem:[%s233 + $0x30] sm:$0xff] %v246
                %v248 = vld [vmem:[%s232 + $0x70] sm:$0xff]
                %249 = vst [vmem:[%s233 + $0x38] sm:$0xff] %v248
                %v250 = vld [vmem:[%s232 + $0x80] sm:$0xff]
                %251 = vst [vmem:[%s233 + $0x40] sm:$0xff] %v250
                %v252 = vld [vmem:[%s232 + $0x90] sm:$0xff]
                %253 = vst [vmem:[%s233 + $0x48] sm:$0xff] %v252
              $region45: #{net_forward.3} parent=39 // loop_footer
                %s231 = sadd.s32 1, %s227
              $region46: #{net_forward.3} parent=39 // loop_footer_branch
                %226 = sbr.rel target = $region42
              $region47: #{net_forward.3} parent=39 // loop_exit
                _
            $region40: #{net_forward.3} parent=31 // pred_fallthru
              _
          $region32: #{net_forward.3} parent=27 // pred_fallthru
            _
          %286 = vnop
        $region28: #{net_forward.3} parent=23 // pred_fallthru
          _
        // Predicated region
        $region63: #{net_forward.3} parent=23 // pred_check
          %p287 = pneg %p100
        $region64: #{net_forward.3} parent=23 // pred_check_branch
          %289 = sbr.rel (%p287) target = $region66
        $region65: #{net_forward.3} parent=23 // pred_region
          %s290 = sand.u32 %s90, 1
          %s291 = sand.u32 %s90, 1
          %s292 = smul.addr %s291, 80
          %s293 = scalar_lea.vmem [#allocation3], %s292
          %s294 = smul.u32 2, %s12
          %s295 = smul.addr %s294, 4
          %s296 = scalar_lea.vmem %s3, %s295
          // Predicated region
          $region67: #{net_forward.3} parent=65 // pred_check
            _
          $region68: #{net_forward.3} parent=65 // pred_check_branch
            %298 = sbr.rel (0) target = $region70
          $region69: #{net_forward.3} parent=65 // pred_region
            // Predicated region
            $region71: #{net_forward.3} parent=69 // pred_check
              _
            $region72: #{net_forward.3} parent=69 // pred_check_branch
              %300 = sbr.rel (0) target = $region74
            $region73: #{net_forward.3} parent=69 // pred_region
              // Predicated region
              $region86: #{net_forward.3} parent=73 // pred_check
                _
              $region87: #{net_forward.3} parent=73 // pred_check_branch
                %333 = sbr.rel (0) target = $region89
              $region88: #{net_forward.3} parent=73 // pred_region
                loop: start=0, step=1, limit=1
                $region90: #{net_forward.3} parent=88 // loop_pre_header
                  _
                $region91: #{net_forward.3} parent=88 // loop_header
                  %s335 = sphi 0, %s339
                  %p336 = scmp.ge.s32.totalorder %s335, 1
                  %s340 = sphi %s296, %s296
                  %s341 = sphi %s293, %s293
                $region92: #{net_forward.3} parent=88 // loop_header_branch
                  %338 = sbr.rel (%p336) target = $region96
                $region93: #{net_forward.3} parent=88 // loop_body
                  %v342 = vld [vmem:[%s340] sm:$0xff]
                  %343 = vst [vmem:[%s341] sm:$0xff] %v342
                  %v344 = vld [vmem:[%s340 + $0x10] sm:$0xff]
                  %345 = vst [vmem:[%s341 + $0x8] sm:$0xff] %v344
                  %v346 = vld [vmem:[%s340 + $0x20] sm:$0xff]
                  %347 = vst [vmem:[%s341 + $0x10] sm:$0xff] %v346
                  %v348 = vld [vmem:[%s340 + $0x30] sm:$0xff]
                  %349 = vst [vmem:[%s341 + $0x18] sm:$0xff] %v348
                  %v350 = vld [vmem:[%s340 + $0x40] sm:$0xff]
                  %351 = vst [vmem:[%s341 + $0x20] sm:$0xff] %v350
                  %v352 = vld [vmem:[%s340 + $0x50] sm:$0xff]
                  %353 = vst [vmem:[%s341 + $0x28] sm:$0xff] %v352
                  %v354 = vld [vmem:[%s340 + $0x60] sm:$0xff]
                  %355 = vst [vmem:[%s341 + $0x30] sm:$0xff] %v354
                  %v356 = vld [vmem:[%s340 + $0x70] sm:$0xff]
                  %357 = vst [vmem:[%s341 + $0x38] sm:$0xff] %v356
                  %v358 = vld [vmem:[%s340 + $0x80] sm:$0xff]
                  %359 = vst [vmem:[%s341 + $0x40] sm:$0xff] %v358
                  %v360 = vld [vmem:[%s340 + $0x90] sm:$0xff]
                  %361 = vst [vmem:[%s341 + $0x48] sm:$0xff] %v360
                $region94: #{net_forward.3} parent=88 // loop_footer
                  %s339 = sadd.s32 1, %s335
                $region95: #{net_forward.3} parent=88 // loop_footer_branch
                  %334 = sbr.rel target = $region91
                $region96: #{net_forward.3} parent=88 // loop_exit
                  _
              $region89: #{net_forward.3} parent=73 // pred_fallthru
                _
              // Predicated region
              $region97: #{net_forward.3} parent=73 // pred_check
                _
              $region98: #{net_forward.3} parent=73 // pred_check_branch
                %363 = sbr.rel target = $region100
              $region99: #{net_forward.3} parent=73 // pred_region
                _
              $region100: #{net_forward.3} parent=73 // pred_fallthru
                _
            $region74: #{net_forward.3} parent=69 // pred_fallthru
              _
            // Predicated region
            $region75: #{net_forward.3} parent=69 // pred_check
              _
            $region76: #{net_forward.3} parent=69 // pred_check_branch
              %302 = sbr.rel target = $region78
            $region77: #{net_forward.3} parent=69 // pred_region
              loop: start=0, step=1, limit=1
              $region79: #{net_forward.3} parent=77 // loop_pre_header
                _
              $region80: #{net_forward.3} parent=77 // loop_header
                %s305 = sphi 0, %s309
                %p306 = scmp.ge.s32.totalorder %s305, 1
                %s310 = sphi %s296, %s296
                %s311 = sphi %s293, %s293
              $region81: #{net_forward.3} parent=77 // loop_header_branch
                %308 = sbr.rel (%p306) target = $region85
              $region82: #{net_forward.3} parent=77 // loop_body
                %v312 = vld [vmem:[%s310] sm:$0xff]
                %313 = vst [vmem:[%s311] sm:$0xff] %v312
                %v314 = vld [vmem:[%s310 + $0x10] sm:$0xff]
                %315 = vst [vmem:[%s311 + $0x8] sm:$0xff] %v314
                %v316 = vld [vmem:[%s310 + $0x20] sm:$0xff]
                %317 = vst [vmem:[%s311 + $0x10] sm:$0xff] %v316
                %v318 = vld [vmem:[%s310 + $0x30] sm:$0xff]
                %319 = vst [vmem:[%s311 + $0x18] sm:$0xff] %v318
                %v320 = vld [vmem:[%s310 + $0x40] sm:$0xff]
                %321 = vst [vmem:[%s311 + $0x20] sm:$0xff] %v320
                %v322 = vld [vmem:[%s310 + $0x50] sm:$0xff]
                %323 = vst [vmem:[%s311 + $0x28] sm:$0xff] %v322
                %v324 = vld [vmem:[%s310 + $0x60] sm:$0xff]
                %325 = vst [vmem:[%s311 + $0x30] sm:$0xff] %v324
                %v326 = vld [vmem:[%s310 + $0x70] sm:$0xff]
                %327 = vst [vmem:[%s311 + $0x38] sm:$0xff] %v326
                %v328 = vld [vmem:[%s310 + $0x80] sm:$0xff]
                %329 = vst [vmem:[%s311 + $0x40] sm:$0xff] %v328
                %v330 = vld [vmem:[%s310 + $0x90] sm:$0xff]
                %331 = vst [vmem:[%s311 + $0x48] sm:$0xff] %v330
              $region83: #{net_forward.3} parent=77 // loop_footer
                %s309 = sadd.s32 1, %s305
              $region84: #{net_forward.3} parent=77 // loop_footer_branch
                %304 = sbr.rel target = $region80
              $region85: #{net_forward.3} parent=77 // loop_exit
                _
            $region78: #{net_forward.3} parent=69 // pred_fallthru
              _
          $region70: #{net_forward.3} parent=65 // pred_fallthru
            _
          %364 = vnop
        $region66: #{net_forward.3} parent=23 // pred_fallthru
          _
        // Predicated region
        $region101: #{net_forward.3} parent=23 // pred_check
          %p365 = pneg %p126
        $region102: #{net_forward.3} parent=23 // pred_check_branch
          %367 = sbr.rel (%p365) target = $region104
        $region103: #{net_forward.3} parent=23 // pred_region
          %s368 = sand.u32 %s116, 1
          %s369 = sand.u32 %s116, 1
          %s370 = smul.addr %s369, 80
          %s371 = scalar_lea.vmem [#allocation4], %s370
          %s372 = smul.u32 2, %s12
          %s373 = smul.addr %s372, 4
          %s374 = scalar_lea.vmem %s4, %s373
          // Predicated region
          $region105: #{net_forward.3} parent=103 // pred_check
            _
          $region106: #{net_forward.3} parent=103 // pred_check_branch
            %376 = sbr.rel (0) target = $region108
          $region107: #{net_forward.3} parent=103 // pred_region
            // Predicated region
            $region109: #{net_forward.3} parent=107 // pred_check
              _
            $region110: #{net_forward.3} parent=107 // pred_check_branch
              %378 = sbr.rel (0) target = $region112
            $region111: #{net_forward.3} parent=107 // pred_region
              // Predicated region
              $region124: #{net_forward.3} parent=111 // pred_check
                _
              $region125: #{net_forward.3} parent=111 // pred_check_branch
                %411 = sbr.rel (0) target = $region127
              $region126: #{net_forward.3} parent=111 // pred_region
                loop: start=0, step=1, limit=1
                $region128: #{net_forward.3} parent=126 // loop_pre_header
                  _
                $region129: #{net_forward.3} parent=126 // loop_header
                  %s413 = sphi 0, %s417
                  %p414 = scmp.ge.s32.totalorder %s413, 1
                  %s418 = sphi %s374, %s374
                  %s419 = sphi %s371, %s371
                $region130: #{net_forward.3} parent=126 // loop_header_branch
                  %416 = sbr.rel (%p414) target = $region134
                $region131: #{net_forward.3} parent=126 // loop_body
                  %v420 = vld [vmem:[%s418] sm:$0xff]
                  %421 = vst [vmem:[%s419] sm:$0xff] %v420
                  %v422 = vld [vmem:[%s418 + $0x10] sm:$0xff]
                  %423 = vst [vmem:[%s419 + $0x8] sm:$0xff] %v422
                  %v424 = vld [vmem:[%s418 + $0x20] sm:$0xff]
                  %425 = vst [vmem:[%s419 + $0x10] sm:$0xff] %v424
                  %v426 = vld [vmem:[%s418 + $0x30] sm:$0xff]
                  %427 = vst [vmem:[%s419 + $0x18] sm:$0xff] %v426
                  %v428 = vld [vmem:[%s418 + $0x40] sm:$0xff]
                  %429 = vst [vmem:[%s419 + $0x20] sm:$0xff] %v428
                  %v430 = vld [vmem:[%s418 + $0x50] sm:$0xff]
                  %431 = vst [vmem:[%s419 + $0x28] sm:$0xff] %v430
                  %v432 = vld [vmem:[%s418 + $0x60] sm:$0xff]
                  %433 = vst [vmem:[%s419 + $0x30] sm:$0xff] %v432
                  %v434 = vld [vmem:[%s418 + $0x70] sm:$0xff]
                  %435 = vst [vmem:[%s419 + $0x38] sm:$0xff] %v434
                  %v436 = vld [vmem:[%s418 + $0x80] sm:$0xff]
                  %437 = vst [vmem:[%s419 + $0x40] sm:$0xff] %v436
                  %v438 = vld [vmem:[%s418 + $0x90] sm:$0xff]
                  %439 = vst [vmem:[%s419 + $0x48] sm:$0xff] %v438
                $region132: #{net_forward.3} parent=126 // loop_footer
                  %s417 = sadd.s32 1, %s413
                $region133: #{net_forward.3} parent=126 // loop_footer_branch
                  %412 = sbr.rel target = $region129
                $region134: #{net_forward.3} parent=126 // loop_exit
                  _
              $region127: #{net_forward.3} parent=111 // pred_fallthru
                _
              // Predicated region
              $region135: #{net_forward.3} parent=111 // pred_check
                _
              $region136: #{net_forward.3} parent=111 // pred_check_branch
                %441 = sbr.rel target = $region138
              $region137: #{net_forward.3} parent=111 // pred_region
                _
              $region138: #{net_forward.3} parent=111 // pred_fallthru
                _
            $region112: #{net_forward.3} parent=107 // pred_fallthru
              _
            // Predicated region
            $region113: #{net_forward.3} parent=107 // pred_check
              _
            $region114: #{net_forward.3} parent=107 // pred_check_branch
              %380 = sbr.rel target = $region116
            $region115: #{net_forward.3} parent=107 // pred_region
              loop: start=0, step=1, limit=1
              $region117: #{net_forward.3} parent=115 // loop_pre_header
                _
              $region118: #{net_forward.3} parent=115 // loop_header
                %s383 = sphi 0, %s387
                %p384 = scmp.ge.s32.totalorder %s383, 1
                %s388 = sphi %s374, %s374
                %s389 = sphi %s371, %s371
              $region119: #{net_forward.3} parent=115 // loop_header_branch
                %386 = sbr.rel (%p384) target = $region123
              $region120: #{net_forward.3} parent=115 // loop_body
                %v390 = vld [vmem:[%s388] sm:$0xff]
                %391 = vst [vmem:[%s389] sm:$0xff] %v390
                %v392 = vld [vmem:[%s388 + $0x10] sm:$0xff]
                %393 = vst [vmem:[%s389 + $0x8] sm:$0xff] %v392
                %v394 = vld [vmem:[%s388 + $0x20] sm:$0xff]
                %395 = vst [vmem:[%s389 + $0x10] sm:$0xff] %v394
                %v396 = vld [vmem:[%s388 + $0x30] sm:$0xff]
                %397 = vst [vmem:[%s389 + $0x18] sm:$0xff] %v396
                %v398 = vld [vmem:[%s388 + $0x40] sm:$0xff]
                %399 = vst [vmem:[%s389 + $0x20] sm:$0xff] %v398
                %v400 = vld [vmem:[%s388 + $0x50] sm:$0xff]
                %401 = vst [vmem:[%s389 + $0x28] sm:$0xff] %v400
                %v402 = vld [vmem:[%s388 + $0x60] sm:$0xff]
                %403 = vst [vmem:[%s389 + $0x30] sm:$0xff] %v402
                %v404 = vld [vmem:[%s388 + $0x70] sm:$0xff]
                %405 = vst [vmem:[%s389 + $0x38] sm:$0xff] %v404
                %v406 = vld [vmem:[%s388 + $0x80] sm:$0xff]
                %407 = vst [vmem:[%s389 + $0x40] sm:$0xff] %v406
                %v408 = vld [vmem:[%s388 + $0x90] sm:$0xff]
                %409 = vst [vmem:[%s389 + $0x48] sm:$0xff] %v408
              $region121: #{net_forward.3} parent=115 // loop_footer
                %s387 = sadd.s32 1, %s383
              $region122: #{net_forward.3} parent=115 // loop_footer_branch
                %382 = sbr.rel target = $region118
              $region123: #{net_forward.3} parent=115 // loop_exit
                _
            $region116: #{net_forward.3} parent=107 // pred_fallthru
              _
          $region108: #{net_forward.3} parent=103 // pred_fallthru
            _
          %442 = vnop
        $region104: #{net_forward.3} parent=23 // pred_fallthru
          _
        // Predicated region
        $region139: #{net_forward.3} parent=23 // pred_check
          %p443 = pneg %p152
        $region140: #{net_forward.3} parent=23 // pred_check_branch
          %445 = sbr.rel (%p443) target = $region142
        $region141: #{net_forward.3} parent=23 // pred_region
          %s446 = sand.u32 %s142, 1
          %s447 = sand.u32 %s142, 1
          %s448 = smul.addr %s447, 80
          %s449 = scalar_lea.vmem [#allocation5], %s448
          %s450 = smul.u32 2, %s12
          %s451 = smul.addr %s450, 4
          %s452 = scalar_lea.vmem %s5, %s451
          // Predicated region
          $region143: #{net_forward.3} parent=141 // pred_check
            _
          $region144: #{net_forward.3} parent=141 // pred_check_branch
            %454 = sbr.rel (0) target = $region146
          $region145: #{net_forward.3} parent=141 // pred_region
            // Predicated region
            $region147: #{net_forward.3} parent=145 // pred_check
              _
            $region148: #{net_forward.3} parent=145 // pred_check_branch
              %456 = sbr.rel (0) target = $region150
            $region149: #{net_forward.3} parent=145 // pred_region
              // Predicated region
              $region162: #{net_forward.3} parent=149 // pred_check
                _
              $region163: #{net_forward.3} parent=149 // pred_check_branch
                %489 = sbr.rel (0) target = $region165
              $region164: #{net_forward.3} parent=149 // pred_region
                loop: start=0, step=1, limit=1
                $region166: #{net_forward.3} parent=164 // loop_pre_header
                  _
                $region167: #{net_forward.3} parent=164 // loop_header
                  %s491 = sphi 0, %s495
                  %p492 = scmp.ge.s32.totalorder %s491, 1
                  %s496 = sphi %s452, %s452
                  %s497 = sphi %s449, %s449
                $region168: #{net_forward.3} parent=164 // loop_header_branch
                  %494 = sbr.rel (%p492) target = $region172
                $region169: #{net_forward.3} parent=164 // loop_body
                  %v498 = vld [vmem:[%s496] sm:$0xff]
                  %499 = vst [vmem:[%s497] sm:$0xff] %v498
                  %v500 = vld [vmem:[%s496 + $0x10] sm:$0xff]
                  %501 = vst [vmem:[%s497 + $0x8] sm:$0xff] %v500
                  %v502 = vld [vmem:[%s496 + $0x20] sm:$0xff]
                  %503 = vst [vmem:[%s497 + $0x10] sm:$0xff] %v502
                  %v504 = vld [vmem:[%s496 + $0x30] sm:$0xff]
                  %505 = vst [vmem:[%s497 + $0x18] sm:$0xff] %v504
                  %v506 = vld [vmem:[%s496 + $0x40] sm:$0xff]
                  %507 = vst [vmem:[%s497 + $0x20] sm:$0xff] %v506
                  %v508 = vld [vmem:[%s496 + $0x50] sm:$0xff]
                  %509 = vst [vmem:[%s497 + $0x28] sm:$0xff] %v508
                  %v510 = vld [vmem:[%s496 + $0x60] sm:$0xff]
                  %511 = vst [vmem:[%s497 + $0x30] sm:$0xff] %v510
                  %v512 = vld [vmem:[%s496 + $0x70] sm:$0xff]
                  %513 = vst [vmem:[%s497 + $0x38] sm:$0xff] %v512
                  %v514 = vld [vmem:[%s496 + $0x80] sm:$0xff]
                  %515 = vst [vmem:[%s497 + $0x40] sm:$0xff] %v514
                  %v516 = vld [vmem:[%s496 + $0x90] sm:$0xff]
                  %517 = vst [vmem:[%s497 + $0x48] sm:$0xff] %v516
                $region170: #{net_forward.3} parent=164 // loop_footer
                  %s495 = sadd.s32 1, %s491
                $region171: #{net_forward.3} parent=164 // loop_footer_branch
                  %490 = sbr.rel target = $region167
                $region172: #{net_forward.3} parent=164 // loop_exit
                  _
              $region165: #{net_forward.3} parent=149 // pred_fallthru
                _
              // Predicated region
              $region173: #{net_forward.3} parent=149 // pred_check
                _
              $region174: #{net_forward.3} parent=149 // pred_check_branch
                %519 = sbr.rel target = $region176
              $region175: #{net_forward.3} parent=149 // pred_region
                _
              $region176: #{net_forward.3} parent=149 // pred_fallthru
                _
            $region150: #{net_forward.3} parent=145 // pred_fallthru
              _
            // Predicated region
            $region151: #{net_forward.3} parent=145 // pred_check
              _
            $region152: #{net_forward.3} parent=145 // pred_check_branch
              %458 = sbr.rel target = $region154
            $region153: #{net_forward.3} parent=145 // pred_region
              loop: start=0, step=1, limit=1
              $region155: #{net_forward.3} parent=153 // loop_pre_header
                _
              $region156: #{net_forward.3} parent=153 // loop_header
                %s461 = sphi 0, %s465
                %p462 = scmp.ge.s32.totalorder %s461, 1
                %s466 = sphi %s452, %s452
                %s467 = sphi %s449, %s449
              $region157: #{net_forward.3} parent=153 // loop_header_branch
                %464 = sbr.rel (%p462) target = $region161
              $region158: #{net_forward.3} parent=153 // loop_body
                %v468 = vld [vmem:[%s466] sm:$0xff]
                %469 = vst [vmem:[%s467] sm:$0xff] %v468
                %v470 = vld [vmem:[%s466 + $0x10] sm:$0xff]
                %471 = vst [vmem:[%s467 + $0x8] sm:$0xff] %v470
                %v472 = vld [vmem:[%s466 + $0x20] sm:$0xff]
                %473 = vst [vmem:[%s467 + $0x10] sm:$0xff] %v472
                %v474 = vld [vmem:[%s466 + $0x30] sm:$0xff]
                %475 = vst [vmem:[%s467 + $0x18] sm:$0xff] %v474
                %v476 = vld [vmem:[%s466 + $0x40] sm:$0xff]
                %477 = vst [vmem:[%s467 + $0x20] sm:$0xff] %v476
                %v478 = vld [vmem:[%s466 + $0x50] sm:$0xff]
                %479 = vst [vmem:[%s467 + $0x28] sm:$0xff] %v478
                %v480 = vld [vmem:[%s466 + $0x60] sm:$0xff]
                %481 = vst [vmem:[%s467 + $0x30] sm:$0xff] %v480
                %v482 = vld [vmem:[%s466 + $0x70] sm:$0xff]
                %483 = vst [vmem:[%s467 + $0x38] sm:$0xff] %v482
                %v484 = vld [vmem:[%s466 + $0x80] sm:$0xff]
                %485 = vst [vmem:[%s467 + $0x40] sm:$0xff] %v484
                %v486 = vld [vmem:[%s466 + $0x90] sm:$0xff]
                %487 = vst [vmem:[%s467 + $0x48] sm:$0xff] %v486
              $region159: #{net_forward.3} parent=153 // loop_footer
                %s465 = sadd.s32 1, %s461
              $region160: #{net_forward.3} parent=153 // loop_footer_branch
                %460 = sbr.rel target = $region156
              $region161: #{net_forward.3} parent=153 // loop_exit
                _
            $region154: #{net_forward.3} parent=145 // pred_fallthru
              _
          $region146: #{net_forward.3} parent=141 // pred_fallthru
            _
          %520 = vnop
        $region142: #{net_forward.3} parent=23 // pred_fallthru
          _
      $region24: #{net_forward.3} parent=5 // pred_fallthru
        _
      %p521 = scmp.le.s32.totalorder 1, %s12
      %p522 = scmp.lt.s32.totalorder %s12, 3
      %p523 = pnand %p521, %p522
      %p524 = pneg %p523
      // Predicated region
      $region177: #{net_forward.3} parent=5 // pred_check
        _
      $region178: #{net_forward.3} parent=5 // pred_check_branch
        %526 = sbr.rel (%p523) target = $region180
      $region179: #{net_forward.3} parent=5 // pred_region
        %s527 = ssub.s32 %s12, 1
        %s528 = sand.u32 %s67, 1
        %s529 = sand.u32 %s67, 1
        %s530 = smul.addr %s529, 80
        %s531 = scalar_lea.vmem [#allocation2], %s530
        // Predicated region
        $region181: #{net_forward.3} parent=179 // pred_check
          %p532 = pneg %p80
        $region182: #{net_forward.3} parent=179 // pred_check_branch
          %534 = sbr.rel (%p532) target = $region184
        $region183: #{net_forward.3} parent=179 // pred_region
          _
        $region184: #{net_forward.3} parent=179 // pred_fallthru
          _
        %s535 = sand.u32 %s93, 1
        %s536 = sand.u32 %s93, 1
        %s537 = smul.addr %s536, 80
        %s538 = scalar_lea.vmem [#allocation3], %s537
        // Predicated region
        $region185: #{net_forward.3} parent=179 // pred_check
          %p539 = pneg %p106
        $region186: #{net_forward.3} parent=179 // pred_check_branch
          %541 = sbr.rel (%p539) target = $region188
        $region187: #{net_forward.3} parent=179 // pred_region
          _
        $region188: #{net_forward.3} parent=179 // pred_fallthru
          _
        %s542 = sand.u32 %s119, 1
        %s543 = sand.u32 %s119, 1
        %s544 = smul.addr %s543, 80
        %s545 = scalar_lea.vmem [#allocation4], %s544
        // Predicated region
        $region189: #{net_forward.3} parent=179 // pred_check
          %p546 = pneg %p132
        $region190: #{net_forward.3} parent=179 // pred_check_branch
          %548 = sbr.rel (%p546) target = $region192
        $region191: #{net_forward.3} parent=179 // pred_region
          _
        $region192: #{net_forward.3} parent=179 // pred_fallthru
          _
        %s549 = sand.u32 %s145, 1
        %s550 = sand.u32 %s145, 1
        %s551 = smul.addr %s550, 80
        %s552 = scalar_lea.vmem [#allocation5], %s551
        // Predicated region
        $region193: #{net_forward.3} parent=179 // pred_check
          %p553 = pneg %p158
        $region194: #{net_forward.3} parent=179 // pred_check_branch
          %555 = sbr.rel (%p553) target = $region196
        $region195: #{net_forward.3} parent=179 // pred_region
          _
        $region196: #{net_forward.3} parent=179 // pred_fallthru
          _
        %p556 = pneg %p33
        %p557 = pneg %p30
        %p558 = pneg %p54
        %p559 = pneg %p51
        %s560 = sand.u32 %s67, 1
        %s561 = sand.u32 %s67, 1
        %s562 = smul.addr %s561, 80
        %s563 = scalar_lea.vmem [#allocation2], %s562
        %p564 = pneg %p80
        %p565 = pneg %p77
        %s566 = sand.u32 %s93, 1
        %s567 = sand.u32 %s93, 1
        %s568 = smul.addr %s567, 80
        %s569 = scalar_lea.vmem [#allocation3], %s568
        %p570 = pneg %p106
        %p571 = pneg %p103
        %s572 = sand.u32 %s119, 1
        %s573 = sand.u32 %s119, 1
        %s574 = smul.addr %s573, 80
        %s575 = scalar_lea.vmem [#allocation4], %s574
        %p576 = pneg %p132
        %p577 = pneg %p129
        %s578 = sand.u32 %s145, 1
        %s579 = sand.u32 %s145, 1
        %s580 = smul.addr %s579, 80
        %s581 = scalar_lea.vmem [#allocation5], %s580
        %p582 = pneg %p158
        %p583 = pneg %p155
        %p584 = pneg %p184
        %p585 = pneg %p181
        %s586 = smul.u32 2, %s17
        %p587 = scmp.lt.s32.totalorder %s586, 3
        %s588 = scalar_select %p587, %s586, 3
        %s589 = smul.addr %s588, 4
        %s590 = scalar_lea.vmem %s6, %s589
        %s591 = smul.u32 2, %s17
        %s592 = smul.u32 2, %s17
        %s593 = smul.u32 2, %s17
        %s594 = smul.u32 2, %s17
        %s595 = smul.u32 2, %s17
        %p596 = scmp.lt.s32.totalorder %s595, 3
        %s597 = scalar_select %p596, %s595, 3
        %s598 = smul.addr %s597, 4
        %s599 = scalar_lea.vmem %s6, %s598
        %s600 = smul.u32 2, %s17
        %v602 = vld [vmem:[%s0] sm:$0x7]
        %v603 = vld [vmem:[%s531] sm:$0xff]
        %v604 = vld [vmem:[%s531 + $0x8] sm:$0xff]
        %v605 = vld [vmem:[%s531 + $0x10] sm:$0xff]
        %v606 = vld [vmem:[%s531 + $0x18] sm:$0xff]
        %v607 = vld [vmem:[%s531 + $0x20] sm:$0xff]
        %v608 = vld [vmem:[%s531 + $0x28] sm:$0xff]
        %v609 = vld [vmem:[%s531 + $0x30] sm:$0xff]
        %v610 = vld [vmem:[%s531 + $0x38] sm:$0xff]
        %v611 = vld [vmem:[%s531 + $0x40] sm:$0xff]
        %v612 = vld [vmem:[%s531 + $0x48] sm:$0x33]
        %v623 = vunpack.c.l.b16 %v603
        %v624 = vunpack.c.h.b16 %v603
        %v625 = vunpack.c.l.b16 %v604
        %v626 = vunpack.c.h.b16 %v604
        %v627 = vunpack.c.l.b16 %v605
        %v628 = vunpack.c.h.b16 %v605
        %v629 = vunpack.c.l.b16 %v606
        %v630 = vunpack.c.h.b16 %v606
        %v631 = vunpack.c.l.b16 %v607
        %v632 = vunpack.c.h.b16 %v607
        %v633 = vunpack.c.l.b16 %v608
        %v634 = vunpack.c.h.b16 %v608
        %v635 = vunpack.c.l.b16 %v609
        %v636 = vunpack.c.h.b16 %v609
        %v637 = vunpack.c.l.b16 %v610
        %v638 = vunpack.c.h.b16 %v610
        %v639 = vunpack.c.l.b16 %v611
        %v640 = vunpack.c.h.b16 %v611
        %v641 = vunpack.c.l.b16 %v612
        %v642 = vunpack.c.h.b16 %v612
        %v643 = vpack.c.b16 %v625, %v623
        %v644 = vpack.c.b16 %v626, %v624
        %v645 = vpack.c.b16 %v629, %v627
        %v646 = vpack.c.b16 %v630, %v628
        %v647 = vpack.c.b16 %v633, %v631
        %v648 = vpack.c.b16 %v634, %v632
        %v649 = vpack.c.b16 %v637, %v635
        %v650 = vpack.c.b16 %v638, %v636
        %v651 = vpack.c.b16 %v641, %v639
        %v652 = vpack.c.b16 %v642, %v640
        %vm661 = vcmask 613376
        %v663 = vsel %vm661, %v602, 0
        %vm665 = vcmask 1044480
        %vm666 = vcmask 1045504
        %v667 = vsel %vm665, 4294967295, 65535
        %v668 = vsel %vm666, %v667, 0
        %v670 = vand.u32 %v651, %v668
        %v673 = vand.u32 %v652, %v668
        %675 = vmatprep.subr.bf16.mxu0 %v644
        %676 = vmatpush1.bf16.msra.mxu0 %v643
        %677 = vmatprep.subr.bf16.mxu0 %v646
        %678 = vmatpush1.bf16.msra.mxu0 %v645
        %679 = vmatprep.subr.bf16.mxu0 %v648
        %680 = vmatpush1.bf16.msra.mxu0 %v647
        %681 = vmatprep.subr.bf16.mxu0 %v650
        %682 = vmatpush1.bf16.msra.mxu0 %v649
        %683 = vmatprep.subr.bf16.mxu0 %v673
        %684 = vmatpush1.bf16.msra.mxu0 %v670
        %685 = vmatprep.subr.bf16.mxu0 0
        %686 = vmatpush1.bf16.msra.mxu0 0
        %687 = vmatprep.subr.bf16.mxu0 0
        %688 = vmatpush1.bf16.msra.mxu0 0
        %689 = vmatprep.subr.bf16.mxu0 0
        %690 = vmatpush1.bf16.msra.mxu0 0
        %691 = vmatprep.subr.bf16.mxu0 0
        %692 = vmatpush1.bf16.msra.mxu0 0
        %693 = vmatprep.subr.bf16.mxu0 0
        %694 = vmatpush1.bf16.msra.mxu0 0
        %695 = vmatprep.subr.bf16.mxu0 0
        %696 = vmatpush1.bf16.msra.mxu0 0
        %697 = vmatprep.subr.bf16.mxu0 0
        %698 = vmatpush1.bf16.msra.mxu0 0
        %699 = vmatprep.subr.bf16.mxu0 0
        %700 = vmatpush1.bf16.msra.mxu0 0
        %701 = vmatprep.subr.bf16.mxu0 0
        %702 = vmatpush1.bf16.msra.mxu0 0
        %703 = vmatprep.subr.bf16.mxu0 0
        %704 = vmatpush1.bf16.msra.mxu0 0
        %705 = vmatprep.subr.bf16.mxu0 0
        %706 = vmatpush1.bf16.msra.mxu0 0
        %707 = vmatprep.mubr.bf16.mxu0 0
        %708 = vmatmul.mubr.bf16.gmra.mrb[0].mxu0 %v663
        %v709 = vpop.f32.mrb[0].mxu0
        %v710 = vadd.f32 0.0, %v709
        %v711 = vpop.f32.mrb[0].mxu0
        %v712 = vadd.f32 0.0, %v711
        %v713 = vpop.f32.mrb[0].mxu0
        %v714 = vpop.f32.mrb[0].mxu0
        %715 = vdwg.mxu0
        %v716 = vld [vmem:[%s538] sm:$0xff]
        %v717 = vld [vmem:[%s538 + $0x8] sm:$0xff]
        %v718 = vld [vmem:[%s538 + $0x10] sm:$0xff]
        %v719 = vld [vmem:[%s538 + $0x18] sm:$0xff]
        %v720 = vld [vmem:[%s538 + $0x20] sm:$0xff]
        %v721 = vld [vmem:[%s538 + $0x28] sm:$0xff]
        %v722 = vld [vmem:[%s538 + $0x30] sm:$0xff]
        %v723 = vld [vmem:[%s538 + $0x38] sm:$0xff]
        %v724 = vld [vmem:[%s538 + $0x40] sm:$0xff]
        %v725 = vld [vmem:[%s538 + $0x48] sm:$0x33]
        %v736 = vunpack.c.l.b16 %v716
        %v737 = vunpack.c.h.b16 %v716
        %v738 = vunpack.c.l.b16 %v717
        %v739 = vunpack.c.h.b16 %v717
        %v740 = vunpack.c.l.b16 %v718
        %v741 = vunpack.c.h.b16 %v718
        %v742 = vunpack.c.l.b16 %v719
        %v743 = vunpack.c.h.b16 %v719
        %v744 = vunpack.c.l.b16 %v720
        %v745 = vunpack.c.h.b16 %v720
        %v746 = vunpack.c.l.b16 %v721
        %v747 = vunpack.c.h.b16 %v721
        %v748 = vunpack.c.l.b16 %v722
        %v749 = vunpack.c.h.b16 %v722
        %v750 = vunpack.c.l.b16 %v723
        %v751 = vunpack.c.h.b16 %v723
        %v752 = vunpack.c.l.b16 %v724
        %v753 = vunpack.c.h.b16 %v724
        %v754 = vunpack.c.l.b16 %v725
        %v755 = vunpack.c.h.b16 %v725
        %v756 = vpack.c.b16 %v738, %v736
        %v757 = vpack.c.b16 %v739, %v737
        %v758 = vpack.c.b16 %v742, %v740
        %v759 = vpack.c.b16 %v743, %v741
        %v760 = vpack.c.b16 %v746, %v744
        %v761 = vpack.c.b16 %v747, %v745
        %v762 = vpack.c.b16 %v750, %v748
        %v763 = vpack.c.b16 %v751, %v749
        %v764 = vpack.c.b16 %v754, %v752
        %v765 = vpack.c.b16 %v755, %v753
        %v775 = vand.u32 %v764, %v668
        %v778 = vand.u32 %v765, %v668
        %780 = vmatprep.subr.bf16.mxu0 %v757
        %781 = vmatpush1.bf16.msra.mxu0 %v756
        %782 = vmatprep.subr.bf16.mxu0 %v759
        %783 = vmatpush1.bf16.msra.mxu0 %v758
        %784 = vmatprep.subr.bf16.mxu0 %v761
        %785 = vmatpush1.bf16.msra.mxu0 %v760
        %786 = vmatprep.subr.bf16.mxu0 %v763
        %787 = vmatpush1.bf16.msra.mxu0 %v762
        %788 = vmatprep.subr.bf16.mxu0 %v778
        %789 = vmatpush1.bf16.msra.mxu0 %v775
        %790 = vmatprep.subr.bf16.mxu0 0
        %791 = vmatpush1.bf16.msra.mxu0 0
        %792 = vmatprep.subr.bf16.mxu0 0
        %793 = vmatpush1.bf16.msra.mxu0 0
        %794 = vmatprep.subr.bf16.mxu0 0
        %795 = vmatpush1.bf16.msra.mxu0 0
        %796 = vmatprep.subr.bf16.mxu0 0
        %797 = vmatpush1.bf16.msra.mxu0 0
        %798 = vmatprep.subr.bf16.mxu0 0
        %799 = vmatpush1.bf16.msra.mxu0 0
        %800 = vmatprep.subr.bf16.mxu0 0
        %801 = vmatpush1.bf16.msra.mxu0 0
        %802 = vmatprep.subr.bf16.mxu0 0
        %803 = vmatpush1.bf16.msra.mxu0 0
        %804 = vmatprep.subr.bf16.mxu0 0
        %805 = vmatpush1.bf16.msra.mxu0 0
        %806 = vmatprep.subr.bf16.mxu0 0
        %807 = vmatpush1.bf16.msra.mxu0 0
        %808 = vmatprep.subr.bf16.mxu0 0
        %809 = vmatpush1.bf16.msra.mxu0 0
        %810 = vmatprep.subr.bf16.mxu0 0
        %811 = vmatpush1.bf16.msra.mxu0 0
        %812 = vmatprep.mubr.bf16.mxu0 0
        %813 = vmatmul.mubr.bf16.gmra.mrb[0].mxu0 %v663
        %v814 = vpop.f32.mrb[0].mxu0
        %v815 = vadd.f32 0.0, %v814
        %v816 = vpop.f32.mrb[0].mxu0
        %v817 = vadd.f32 0.0, %v816
        %v818 = vpop.f32.mrb[0].mxu0
        %v819 = vpop.f32.mrb[0].mxu0
        %820 = vdwg.mxu0
        %v821 = vmax.f32 %v710, %v815
        %v822 = vmax.f32 %v712, %v817
        %v823 = vld [vmem:[%s545] sm:$0xff]
        %v824 = vld [vmem:[%s545 + $0x8] sm:$0xff]
        %v825 = vld [vmem:[%s545 + $0x10] sm:$0xff]
        %v826 = vld [vmem:[%s545 + $0x18] sm:$0xff]
        %v827 = vld [vmem:[%s545 + $0x20] sm:$0xff]
        %v828 = vld [vmem:[%s545 + $0x28] sm:$0xff]
        %v829 = vld [vmem:[%s545 + $0x30] sm:$0xff]
        %v830 = vld [vmem:[%s545 + $0x38] sm:$0xff]
        %v831 = vld [vmem:[%s545 + $0x40] sm:$0xff]
        %v832 = vld [vmem:[%s545 + $0x48] sm:$0x33]
        %v843 = vunpack.c.l.b16 %v823
        %v844 = vunpack.c.h.b16 %v823
        %v845 = vunpack.c.l.b16 %v824
        %v846 = vunpack.c.h.b16 %v824
        %v847 = vunpack.c.l.b16 %v825
        %v848 = vunpack.c.h.b16 %v825
        %v849 = vunpack.c.l.b16 %v826
        %v850 = vunpack.c.h.b16 %v826
        %v851 = vunpack.c.l.b16 %v827
        %v852 = vunpack.c.h.b16 %v827
        %v853 = vunpack.c.l.b16 %v828
        %v854 = vunpack.c.h.b16 %v828
        %v855 = vunpack.c.l.b16 %v829
        %v856 = vunpack.c.h.b16 %v829
        %v857 = vunpack.c.l.b16 %v830
        %v858 = vunpack.c.h.b16 %v830
        %v859 = vunpack.c.l.b16 %v831
        %v860 = vunpack.c.h.b16 %v831
        %v861 = vunpack.c.l.b16 %v832
        %v862 = vunpack.c.h.b16 %v832
        %v863 = vpack.c.b16 %v845, %v843
        %v864 = vpack.c.b16 %v846, %v844
        %v865 = vpack.c.b16 %v849, %v847
        %v866 = vpack.c.b16 %v850, %v848
        %v867 = vpack.c.b16 %v853, %v851
        %v868 = vpack.c.b16 %v854, %v852
        %v869 = vpack.c.b16 %v857, %v855
        %v870 = vpack.c.b16 %v858, %v856
        %v871 = vpack.c.b16 %v861, %v859
        %v872 = vpack.c.b16 %v862, %v860
        %v882 = vand.u32 %v871, %v668
        %v885 = vand.u32 %v872, %v668
        %887 = vmatprep.subr.bf16.mxu0 %v864
        %888 = vmatpush1.bf16.msra.mxu0 %v863
        %889 = vmatprep.subr.bf16.mxu0 %v866
        %890 = vmatpush1.bf16.msra.mxu0 %v865
        %891 = vmatprep.subr.bf16.mxu0 %v868
        %892 = vmatpush1.bf16.msra.mxu0 %v867
        %893 = vmatprep.subr.bf16.mxu0 %v870
        %894 = vmatpush1.bf16.msra.mxu0 %v869
        %895 = vmatprep.subr.bf16.mxu0 %v885
        %896 = vmatpush1.bf16.msra.mxu0 %v882
        %897 = vmatprep.subr.bf16.mxu0 0
        %898 = vmatpush1.bf16.msra.mxu0 0
        %899 = vmatprep.subr.bf16.mxu0 0
        %900 = vmatpush1.bf16.msra.mxu0 0
        %901 = vmatprep.subr.bf16.mxu0 0
        %902 = vmatpush1.bf16.msra.mxu0 0
        %903 = vmatprep.subr.bf16.mxu0 0
        %904 = vmatpush1.bf16.msra.mxu0 0
        %905 = vmatprep.subr.bf16.mxu0 0
        %906 = vmatpush1.bf16.msra.mxu0 0
        %907 = vmatprep.subr.bf16.mxu0 0
        %908 = vmatpush1.bf16.msra.mxu0 0
        %909 = vmatprep.subr.bf16.mxu0 0
        %910 = vmatpush1.bf16.msra.mxu0 0
        %911 = vmatprep.subr.bf16.mxu0 0
        %912 = vmatpush1.bf16.msra.mxu0 0
        %913 = vmatprep.subr.bf16.mxu0 0
        %914 = vmatpush1.bf16.msra.mxu0 0
        %915 = vmatprep.subr.bf16.mxu0 0
        %916 = vmatpush1.bf16.msra.mxu0 0
        %917 = vmatprep.subr.bf16.mxu0 0
        %918 = vmatpush1.bf16.msra.mxu0 0
        %919 = vmatprep.mubr.bf16.mxu0 0
        %920 = vmatmul.mubr.bf16.gmra.mrb[0].mxu0 %v663
        %v921 = vpop.f32.mrb[0].mxu0
        %v922 = vadd.f32 0.0, %v921
        %v923 = vpop.f32.mrb[0].mxu0
        %v924 = vadd.f32 0.0, %v923
        %v925 = vpop.f32.mrb[0].mxu0
        %v926 = vpop.f32.mrb[0].mxu0
        %927 = vdwg.mxu0
        %v928 = vmax.f32 %v821, %v922
        %v929 = vmax.f32 %v822, %v924
        %v930 = vld [vmem:[%s552] sm:$0xff]
        %v931 = vld [vmem:[%s552 + $0x8] sm:$0xff]
        %v932 = vld [vmem:[%s552 + $0x10] sm:$0xff]
        %v933 = vld [vmem:[%s552 + $0x18] sm:$0xff]
        %v934 = vld [vmem:[%s552 + $0x20] sm:$0xff]
        %v935 = vld [vmem:[%s552 + $0x28] sm:$0xff]
        %v936 = vld [vmem:[%s552 + $0x30] sm:$0xff]
        %v937 = vld [vmem:[%s552 + $0x38] sm:$0xff]
        %v938 = vld [vmem:[%s552 + $0x40] sm:$0xff]
        %v939 = vld [vmem:[%s552 + $0x48] sm:$0x33]
        %v950 = vunpack.c.l.b16 %v930
        %v951 = vunpack.c.h.b16 %v930
        %v952 = vunpack.c.l.b16 %v931
        %v953 = vunpack.c.h.b16 %v931
        %v954 = vunpack.c.l.b16 %v932
        %v955 = vunpack.c.h.b16 %v932
        %v956 = vunpack.c.l.b16 %v933
        %v957 = vunpack.c.h.b16 %v933
        %v958 = vunpack.c.l.b16 %v934
        %v959 = vunpack.c.h.b16 %v934
        %v960 = vunpack.c.l.b16 %v935
        %v961 = vunpack.c.h.b16 %v935
        %v962 = vunpack.c.l.b16 %v936
        %v963 = vunpack.c.h.b16 %v936
        %v964 = vunpack.c.l.b16 %v937
        %v965 = vunpack.c.h.b16 %v937
        %v966 = vunpack.c.l.b16 %v938
        %v967 = vunpack.c.h.b16 %v938
        %v968 = vunpack.c.l.b16 %v939
        %v969 = vunpack.c.h.b16 %v939
        %v970 = vpack.c.b16 %v952, %v950
        %v971 = vpack.c.b16 %v953, %v951
        %v972 = vpack.c.b16 %v956, %v954
        %v973 = vpack.c.b16 %v957, %v955
        %v974 = vpack.c.b16 %v960, %v958
        %v975 = vpack.c.b16 %v961, %v959
        %v976 = vpack.c.b16 %v964, %v962
        %v977 = vpack.c.b16 %v965, %v963
        %v978 = vpack.c.b16 %v968, %v966
        %v979 = vpack.c.b16 %v969, %v967
        %v989 = vand.u32 %v978, %v668
        %v992 = vand.u32 %v979, %v668
        %994 = vmatprep.subr.bf16.mxu0 %v971
        %995 = vmatpush1.bf16.msra.mxu0 %v970
        %996 = vmatprep.subr.bf16.mxu0 %v973
        %997 = vmatpush1.bf16.msra.mxu0 %v972
        %998 = vmatprep.subr.bf16.mxu0 %v975
        %999 = vmatpush1.bf16.msra.mxu0 %v974
        %1000 = vmatprep.subr.bf16.mxu0 %v977
        %1001 = vmatpush1.bf16.msra.mxu0 %v976
        %1002 = vmatprep.subr.bf16.mxu0 %v992
        %1003 = vmatpush1.bf16.msra.mxu0 %v989
        %1004 = vmatprep.subr.bf16.mxu0 0
        %1005 = vmatpush1.bf16.msra.mxu0 0
        %1006 = vmatprep.subr.bf16.mxu0 0
        %1007 = vmatpush1.bf16.msra.mxu0 0
        %1008 = vmatprep.subr.bf16.mxu0 0
        %1009 = vmatpush1.bf16.msra.mxu0 0
        %1010 = vmatprep.subr.bf16.mxu0 0
        %1011 = vmatpush1.bf16.msra.mxu0 0
        %1012 = vmatprep.subr.bf16.mxu0 0
        %1013 = vmatpush1.bf16.msra.mxu0 0
        %1014 = vmatprep.subr.bf16.mxu0 0
        %1015 = vmatpush1.bf16.msra.mxu0 0
        %1016 = vmatprep.subr.bf16.mxu0 0
        %1017 = vmatpush1.bf16.msra.mxu0 0
        %1018 = vmatprep.subr.bf16.mxu0 0
        %1019 = vmatpush1.bf16.msra.mxu0 0
        %1020 = vmatprep.subr.bf16.mxu0 0
        %1021 = vmatpush1.bf16.msra.mxu0 0
        %1022 = vmatprep.subr.bf16.mxu0 0
        %1023 = vmatpush1.bf16.msra.mxu0 0
        %1024 = vmatprep.subr.bf16.mxu0 0
        %1025 = vmatpush1.bf16.msra.mxu0 0
        %1026 = vmatprep.mubr.bf16.mxu0 0
        %1027 = vmatmul.mubr.bf16.gmra.mrb[0].mxu0 %v663
        %v1028 = vpop.f32.mrb[0].mxu0
        %v1029 = vadd.f32 0.0, %v1028
        %v1030 = vpop.f32.mrb[0].mxu0
        %v1031 = vadd.f32 0.0, %v1030
        %v1032 = vpop.f32.mrb[0].mxu0
        %v1033 = vpop.f32.mrb[0].mxu0
        %1034 = vdwg.mxu0
        %v1035 = vmax.f32 %v928, %v1029
        %v1036 = vmax.f32 %v929, %v1031
        %v1037 = vld [vmem:[%s1] sm:$0x3f]
        %1039 = vset.pattern.permute.xlu0 0
        %1040 = vperm.xlu0 %1039, %v1037
        %v1041 = vpop.permute.xlu0 %1040
        %v1043 = vadd.f32 %v1035, %v1041
        %v1044 = vadd.f32 %v1036, %v1041
        %v1045 = vmax.f32 %v1043, 0.0
        %v1046 = vmax.f32 %v1044, 0.0
        %v1047 = vpack.c.bf16 %v1045, %v1045
        %v1048 = vpack.c.bf16 %v1046, %v1046
        %v1051 = vunpack.c.l.b16 %v1047
        %v1052 = vunpack.c.l.b16 %v1048
        %v1053 = vpack.c.b16 %v1052, %v1051
        %1055 = vst [vmem:[%s599] sm:$0x77] %v1053
        %s1056 = smul.u32 2, %s17
        %p1057 = scmp.lt.s32.totalorder %s1056, 3
        %s1058 = scalar_select %p1057, %s1056, 3
        %s1059 = smul.addr %s1058, 4
        %s1060 = scalar_lea.vmem %s6, %s1059
        // Predicated region
        $region197: #{net_forward.3} parent=179 // pred_check
          %p1061 = pneg %p181
        $region198: #{net_forward.3} parent=179 // pred_check_branch
          %1063 = sbr.rel (%p1061) target = $region200
        $region199: #{net_forward.3} parent=179 // pred_region
          %s1064 = smul.u32 2, %s17
        $region200: #{net_forward.3} parent=179 // pred_fallthru
          _
      $region180: #{net_forward.3} parent=5 // pred_fallthru
        _
      %p1065 = scmp.le.s32.totalorder 2, %s12
      // Predicated region
      $region201: #{net_forward.3} parent=5 // pred_check
        %p1066 = pneg %p1065
      $region202: #{net_forward.3} parent=5 // pred_check_branch
        %1068 = sbr.rel (%p1066) target = $region204
      $region203: #{net_forward.3} parent=5 // pred_region
        %s1069 = ssub.s32 %s12, 2
        // Predicated region
        $region205: #{net_forward.3} parent=203 // pred_check
          %p1070 = pneg %p187
        $region206: #{net_forward.3} parent=203 // pred_check_branch
          %1072 = sbr.rel (%p1070) target = $region208
        $region207: #{net_forward.3} parent=203 // pred_region
          %s1073 = smul.u32 2, %s18
          %p1074 = scmp.lt.s32.totalorder %s1073, 3
          %s1075 = scalar_select %p1074, %s1073, 3
          %s1076 = smul.addr %s1075, 4
          %s1077 = scalar_lea.vmem %s6, %s1076
        $region208: #{net_forward.3} parent=203 // pred_fallthru
          _
      $region204: #{net_forward.3} parent=5 // pred_fallthru
        _
    $region6: #{net_forward.3} parent=1 // loop_footer
      %s16 = sadd.s32 1, %s12
    $region7: #{net_forward.3} parent=1 // loop_footer_branch
      %11 = sbr.rel target = $region3
    $region8: #{net_forward.3} parent=1 // loop_exit
      _

// kernel: net_forward.4
$region0: #{net_forward.4}
  #allocation0 [shape = 'u32[]', space=smem, size = 0x4, offset = 0x4, fixed_abs, tag = 'smem constant byte address 0x4 - core index']
  #allocation1 [shape = 'u32[144,128]{1,0:T(1,128)}', space=vmem, size = 0x12000, scoped, tag = 'internal scratch']
  %s0 = inlined_call_operand.vmem [shape: bf16[16,150], index: 0, kind: input, shape index: {}]
  %s1 = inlined_call_operand.vmem [shape: f32[16,1], index: 1, kind: input, shape index: {}]
  %s2 = inlined_call_operand.vmem [shape: bf16[150,128], index: 2, kind: input, shape index: {}]
  %s3 = inlined_call_operand.vmem [shape: bf16[150,128], index: 3, kind: input, shape index: {}]
  %s4 = inlined_call_operand.vmem [shape: bf16[150,128], index: 4, kind: input, shape index: {}]
  %s5 = inlined_call_operand.vmem [shape: bf16[150,128], index: 5, kind: input, shape index: {}]
  %s6 = inlined_call_operand.vmem [shape: bf16[16,128], index: 6, kind: output, shape index: {}]
  %s7 = sld [smem:[#allocation0]]
  $region34: #{net_forward.4} parent=0
    _
  %s9 = ssub.s32 1, %s7
  %s10 = scalar_select 0, %s9, %s7
  // Predicated region
  $region2: #{net_forward.4} parent=0 // pred_check
    _
  $region3: #{net_forward.4} parent=0 // pred_check_branch
    %12 = sbr.rel (0) target = $region5
  $region4: #{net_forward.4} parent=0 // pred_region
    _
  $region5: #{net_forward.4} parent=0 // pred_fallthru
    _
  // Predicated region
  $region6: #{net_forward.4} parent=0 // pred_check
    _
  $region7: #{net_forward.4} parent=0 // pred_check_branch
    %14 = sbr.rel (0) target = $region9
  $region8: #{net_forward.4} parent=0 // pred_region
    _
  $region9: #{net_forward.4} parent=0 // pred_fallthru
    _
  // Predicated region
  $region10: #{net_forward.4} parent=0 // pred_check
    _
  $region11: #{net_forward.4} parent=0 // pred_check_branch
    %16 = sbr.rel (0) target = $region13
  $region12: #{net_forward.4} parent=0 // pred_region
    _
  $region13: #{net_forward.4} parent=0 // pred_fallthru
    _
  // Predicated region
  $region14: #{net_forward.4} parent=0 // pred_check
    _
  $region15: #{net_forward.4} parent=0 // pred_check_branch
    %18 = sbr.rel (0) target = $region17
  $region16: #{net_forward.4} parent=0 // pred_region
    _
  $region17: #{net_forward.4} parent=0 // pred_fallthru
    _
  // Predicated region
  $region18: #{net_forward.4} parent=0 // pred_check
    _
  $region19: #{net_forward.4} parent=0 // pred_check_branch
    %20 = sbr.rel (0) target = $region21
  $region20: #{net_forward.4} parent=0 // pred_region
    _
  $region21: #{net_forward.4} parent=0 // pred_fallthru
    _
  // Predicated region
  $region22: #{net_forward.4} parent=0 // pred_check
    _
  $region23: #{net_forward.4} parent=0 // pred_check_branch
    %22 = sbr.rel (0) target = $region25
  $region24: #{net_forward.4} parent=0 // pred_region
    _
  $region25: #{net_forward.4} parent=0 // pred_fallthru
    _
  %v24 = vld [vmem:[%s0] sm:$0xff]
  %v25 = vld [vmem:[%s0 + $0x8] sm:$0xff]
  %v26 = vld [vmem:[%s2] sm:$0xf]
  %v27 = vld [vmem:[%s2 + $0x4] sm:$0xf]
  %v28 = vld [vmem:[%s2 + $0x8] sm:$0xf]
  %v29 = vld [vmem:[%s2 + $0xc] sm:$0xf]
  %v30 = vld [vmem:[%s2 + $0x10] sm:$0xf]
  %v31 = vld [vmem:[%s2 + $0x14] sm:$0xf]
  %v32 = vld [vmem:[%s2 + $0x18] sm:$0xf]
  %v33 = vld [vmem:[%s2 + $0x1c] sm:$0xf]
  %v34 = vld [vmem:[%s2 + $0x20] sm:$0xf]
  %v35 = vld [vmem:[%s2 + $0x24] sm:$0xf]
  %v36 = vld [vmem:[%s2 + $0x28] sm:$0xf]
  %v37 = vld [vmem:[%s2 + $0x2c] sm:$0xf]
  %v38 = vld [vmem:[%s2 + $0x30] sm:$0xf]
  %v39 = vld [vmem:[%s2 + $0x34] sm:$0xf]
  %v40 = vld [vmem:[%s2 + $0x38] sm:$0xf]
  %v41 = vld [vmem:[%s2 + $0x3c] sm:$0xf]
  %v42 = vld [vmem:[%s2 + $0x40] sm:$0xf]
  %v43 = vld [vmem:[%s2 + $0x44] sm:$0xf]
  %v44 = vld [vmem:[%s2 + $0x48] sm:$0x7]
  %v47 = vunpack.c.l.b16 %v24
  %v48 = vunpack.c.h.b16 %v24
  %v49 = vunpack.c.l.b16 %v25
  %v50 = vunpack.c.h.b16 %v25
  %v51 = vpack.c.b16 %v49, %v47
  %v52 = vpack.c.b16 %v50, %v48
  %v73 = vunpack.c.l.b16 %v26
  %v74 = vunpack.c.l.b16 %v27
  %v75 = vunpack.c.l.b16 %v28
  %v76 = vunpack.c.l.b16 %v29
  %v77 = vunpack.c.l.b16 %v30
  %v78 = vunpack.c.l.b16 %v31
  %v79 = vunpack.c.l.b16 %v32
  %v80 = vunpack.c.l.b16 %v33
  %v81 = vunpack.c.l.b16 %v34
  %v82 = vunpack.c.l.b16 %v35
  %v83 = vunpack.c.l.b16 %v36
  %v84 = vunpack.c.l.b16 %v37
  %v85 = vunpack.c.l.b16 %v38
  %v86 = vunpack.c.l.b16 %v39
  %v87 = vunpack.c.l.b16 %v40
  %v88 = vunpack.c.l.b16 %v41
  %v89 = vunpack.c.l.b16 %v42
  %v90 = vunpack.c.l.b16 %v43
  %v91 = vunpack.c.l.b16 %v44
  %v92 = vpack.c.b16 %v74, %v73
  %v93 = vpack.c.b16 %v76, %v75
  %v94 = vpack.c.b16 %v78, %v77
  %v95 = vpack.c.b16 %v80, %v79
  %v96 = vpack.c.b16 %v82, %v81
  %v97 = vpack.c.b16 %v84, %v83
  %v98 = vpack.c.b16 %v86, %v85
  %v99 = vpack.c.b16 %v88, %v87
  %v100 = vpack.c.b16 %v90, %v89
  %v101 = vpack.c.b16 %v91, %v91
  %vm111 = vcmask 179200
  %v113 = vsel %vm111, %v52, 0
  %vm115 = vcmask 1042432
  %v117 = vsel %vm115, %v101, 0
  %119 = vmatprep.subr.bf16.mxu0 0
  %120 = vmatpush1.bf16.msra.mxu0 %v92
  %121 = vmatprep.subr.bf16.mxu0 0
  %122 = vmatpush1.bf16.msra.mxu0 %v93
  %123 = vmatprep.subr.bf16.mxu0 0
  %124 = vmatpush1.bf16.msra.mxu0 %v94
  %125 = vmatprep.subr.bf16.mxu0 0
  %126 = vmatpush1.bf16.msra.mxu0 %v95
  %127 = vmatprep.subr.bf16.mxu0 0
  %128 = vmatpush1.bf16.msra.mxu0 %v96
  %129 = vmatprep.subr.bf16.mxu0 0
  %130 = vmatpush1.bf16.msra.mxu0 %v97
  %131 = vmatprep.subr.bf16.mxu0 0
  %132 = vmatpush1.bf16.msra.mxu0 %v98
  %133 = vmatprep.subr.bf16.mxu0 0
  %134 = vmatpush1.bf16.msra.mxu0 %v99
  %135 = vmatprep.subr.bf16.mxu0 0
  %136 = vmatpush1.bf16.msra.mxu0 %v100
  %137 = vmatprep.subr.bf16.mxu0 0
  %138 = vmatpush1.bf16.msra.mxu0 %v117
  %139 = vmatprep.subr.bf16.mxu0 0
  %140 = vmatpush1.bf16.msra.mxu0 0
  %141 = vmatprep.subr.bf16.mxu0 0
  %142 = vmatpush1.bf16.msra.mxu0 0
  %143 = vmatprep.subr.bf16.mxu0 0
  %144 = vmatpush1.bf16.msra.mxu0 0
  %145 = vmatprep.subr.bf16.mxu0 0
  %146 = vmatpush1.bf16.msra.mxu0 0
  %147 = vmatprep.subr.bf16.mxu0 0
  %148 = vmatpush1.bf16.msra.mxu0 0
  %149 = vmatprep.subr.bf16.mxu0 0
  %150 = vmatpush1.bf16.msra.mxu0 0
  %151 = vmatprep.mubr.bf16.mxu0 %v113
  %152 = vmatmul.mubr.bf16.gmra.mrb[0].mxu0 %v51
  %v153 = vpop.f32.mrb[0].mxu0
  %v154 = vadd.f32 0.0, %v153
  %v155 = vpop.f32.mrb[0].mxu0
  %v156 = vpop.f32.mrb[0].mxu0
  %v157 = vadd.f32 0.0, %v156
  %v158 = vpop.f32.mrb[0].mxu0
  %159 = vdwg.mxu0
  %v160 = vld [vmem:[%s3] sm:$0xf]
  %v161 = vld [vmem:[%s3 + $0x4] sm:$0xf]
  %v162 = vld [vmem:[%s3 + $0x8] sm:$0xf]
  %v163 = vld [vmem:[%s3 + $0xc] sm:$0xf]
  %v164 = vld [vmem:[%s3 + $0x10] sm:$0xf]
  %v165 = vld [vmem:[%s3 + $0x14] sm:$0xf]
  %v166 = vld [vmem:[%s3 + $0x18] sm:$0xf]
  %v167 = vld [vmem:[%s3 + $0x1c] sm:$0xf]
  %v168 = vld [vmem:[%s3 + $0x20] sm:$0xf]
  %v169 = vld [vmem:[%s3 + $0x24] sm:$0xf]
  %v170 = vld [vmem:[%s3 + $0x28] sm:$0xf]
  %v171 = vld [vmem:[%s3 + $0x2c] sm:$0xf]
  %v172 = vld [vmem:[%s3 + $0x30] sm:$0xf]
  %v173 = vld [vmem:[%s3 + $0x34] sm:$0xf]
  %v174 = vld [vmem:[%s3 + $0x38] sm:$0xf]
  %v175 = vld [vmem:[%s3 + $0x3c] sm:$0xf]
  %v176 = vld [vmem:[%s3 + $0x40] sm:$0xf]
  %v177 = vld [vmem:[%s3 + $0x44] sm:$0xf]
  %v178 = vld [vmem:[%s3 + $0x48] sm:$0x7]
  %v198 = vunpack.c.l.b16 %v160
  %v199 = vunpack.c.l.b16 %v161
  %v200 = vunpack.c.l.b16 %v162
  %v201 = vunpack.c.l.b16 %v163
  %v202 = vunpack.c.l.b16 %v164
  %v203 = vunpack.c.l.b16 %v165
  %v204 = vunpack.c.l.b16 %v166
  %v205 = vunpack.c.l.b16 %v167
  %v206 = vunpack.c.l.b16 %v168
  %v207 = vunpack.c.l.b16 %v169
  %v208 = vunpack.c.l.b16 %v170
  %v209 = vunpack.c.l.b16 %v171
  %v210 = vunpack.c.l.b16 %v172
  %v211 = vunpack.c.l.b16 %v173
  %v212 = vunpack.c.l.b16 %v174
  %v213 = vunpack.c.l.b16 %v175
  %v214 = vunpack.c.l.b16 %v176
  %v215 = vunpack.c.l.b16 %v177
  %v216 = vunpack.c.l.b16 %v178
  %v217 = vpack.c.b16 %v199, %v198
  %v218 = vpack.c.b16 %v201, %v200
  %v219 = vpack.c.b16 %v203, %v202
  %v220 = vpack.c.b16 %v205, %v204
  %v221 = vpack.c.b16 %v207, %v206
  %v222 = vpack.c.b16 %v209, %v208
  %v223 = vpack.c.b16 %v211, %v210
  %v224 = vpack.c.b16 %v213, %v212
  %v225 = vpack.c.b16 %v215, %v214
  %v226 = vpack.c.b16 %v216, %v216
  %v237 = vsel %vm115, %v226, 0
  %239 = vmatprep.subr.bf16.mxu0 0
  %240 = vmatpush1.bf16.msra.mxu0 %v217
  %241 = vmatprep.subr.bf16.mxu0 0
  %242 = vmatpush1.bf16.msra.mxu0 %v218
  %243 = vmatprep.subr.bf16.mxu0 0
  %244 = vmatpush1.bf16.msra.mxu0 %v219
  %245 = vmatprep.subr.bf16.mxu0 0
  %246 = vmatpush1.bf16.msra.mxu0 %v220
  %247 = vmatprep.subr.bf16.mxu0 0
  %248 = vmatpush1.bf16.msra.mxu0 %v221
  %249 = vmatprep.subr.bf16.mxu0 0
  %250 = vmatpush1.bf16.msra.mxu0 %v222
  %251 = vmatprep.subr.bf16.mxu0 0
  %252 = vmatpush1.bf16.msra.mxu0 %v223
  %253 = vmatprep.subr.bf16.mxu0 0
  %254 = vmatpush1.bf16.msra.mxu0 %v224
  %255 = vmatprep.subr.bf16.mxu0 0
  %256 = vmatpush1.bf16.msra.mxu0 %v225
  %257 = vmatprep.subr.bf16.mxu0 0
  %258 = vmatpush1.bf16.msra.mxu0 %v237
  %259 = vmatprep.subr.bf16.mxu0 0
  %260 = vmatpush1.bf16.msra.mxu0 0
  %261 = vmatprep.subr.bf16.mxu0 0
  %262 = vmatpush1.bf16.msra.mxu0 0
  %263 = vmatprep.subr.bf16.mxu0 0
  %264 = vmatpush1.bf16.msra.mxu0 0
  %265 = vmatprep.subr.bf16.mxu0 0
  %266 = vmatpush1.bf16.msra.mxu0 0
  %267 = vmatprep.subr.bf16.mxu0 0
  %268 = vmatpush1.bf16.msra.mxu0 0
  %269 = vmatprep.subr.bf16.mxu0 0
  %270 = vmatpush1.bf16.msra.mxu0 0
  %271 = vmatprep.mubr.bf16.mxu0 %v113
  %272 = vmatmul.mubr.bf16.gmra.mrb[0].mxu0 %v51
  %v273 = vpop.f32.mrb[0].mxu0
  %v274 = vadd.f32 0.0, %v273
  %v275 = vpop.f32.mrb[0].mxu0
  %v276 = vpop.f32.mrb[0].mxu0
  %v277 = vadd.f32 0.0, %v276
  %v278 = vpop.f32.mrb[0].mxu0
  %279 = vdwg.mxu0
  %v280 = vmax.f32 %v154, %v274
  %v281 = vmax.f32 %v157, %v277
  %v282 = vld [vmem:[%s4] sm:$0xf]
  %v283 = vld [vmem:[%s4 + $0x4] sm:$0xf]
  %v284 = vld [vmem:[%s4 + $0x8] sm:$0xf]
  %v285 = vld [vmem:[%s4 + $0xc] sm:$0xf]
  %v286 = vld [vmem:[%s4 + $0x10] sm:$0xf]
  %v287 = vld [vmem:[%s4 + $0x14] sm:$0xf]
  %v288 = vld [vmem:[%s4 + $0x18] sm:$0xf]
  %v289 = vld [vmem:[%s4 + $0x1c] sm:$0xf]
  %v290 = vld [vmem:[%s4 + $0x20] sm:$0xf]
  %v291 = vld [vmem:[%s4 + $0x24] sm:$0xf]
  %v292 = vld [vmem:[%s4 + $0x28] sm:$0xf]
  %v293 = vld [vmem:[%s4 + $0x2c] sm:$0xf]
  %v294 = vld [vmem:[%s4 + $0x30] sm:$0xf]
  %v295 = vld [vmem:[%s4 + $0x34] sm:$0xf]
  %v296 = vld [vmem:[%s4 + $0x38] sm:$0xf]
  %v297 = vld [vmem:[%s4 + $0x3c] sm:$0xf]
  %v298 = vld [vmem:[%s4 + $0x40] sm:$0xf]
  %v299 = vld [vmem:[%s4 + $0x44] sm:$0xf]
  %v300 = vld [vmem:[%s4 + $0x48] sm:$0x7]
  %v320 = vunpack.c.l.b16 %v282
  %v321 = vunpack.c.l.b16 %v283
  %v322 = vunpack.c.l.b16 %v284
  %v323 = vunpack.c.l.b16 %v285
  %v324 = vunpack.c.l.b16 %v286
  %v325 = vunpack.c.l.b16 %v287
  %v326 = vunpack.c.l.b16 %v288
  %v327 = vunpack.c.l.b16 %v289
  %v328 = vunpack.c.l.b16 %v290
  %v329 = vunpack.c.l.b16 %v291
  %v330 = vunpack.c.l.b16 %v292
  %v331 = vunpack.c.l.b16 %v293
  %v332 = vunpack.c.l.b16 %v294
  %v333 = vunpack.c.l.b16 %v295
  %v334 = vunpack.c.l.b16 %v296
  %v335 = vunpack.c.l.b16 %v297
  %v336 = vunpack.c.l.b16 %v298
  %v337 = vunpack.c.l.b16 %v299
  %v338 = vunpack.c.l.b16 %v300
  %v339 = vpack.c.b16 %v321, %v320
  %v340 = vpack.c.b16 %v323, %v322
  %v341 = vpack.c.b16 %v325, %v324
  %v342 = vpack.c.b16 %v327, %v326
  %v343 = vpack.c.b16 %v329, %v328
  %v344 = vpack.c.b16 %v331, %v330
  %v345 = vpack.c.b16 %v333, %v332
  %v346 = vpack.c.b16 %v335, %v334
  %v347 = vpack.c.b16 %v337, %v336
  %v348 = vpack.c.b16 %v338, %v338
  %v359 = vsel %vm115, %v348, 0
  %361 = vmatprep.subr.bf16.mxu0 0
  %362 = vmatpush1.bf16.msra.mxu0 %v339
  %363 = vmatprep.subr.bf16.mxu0 0
  %364 = vmatpush1.bf16.msra.mxu0 %v340
  %365 = vmatprep.subr.bf16.mxu0 0
  %366 = vmatpush1.bf16.msra.mxu0 %v341
  %367 = vmatprep.subr.bf16.mxu0 0
  %368 = vmatpush1.bf16.msra.mxu0 %v342
  %369 = vmatprep.subr.bf16.mxu0 0
  %370 = vmatpush1.bf16.msra.mxu0 %v343
  %371 = vmatprep.subr.bf16.mxu0 0
  %372 = vmatpush1.bf16.msra.mxu0 %v344
  %373 = vmatprep.subr.bf16.mxu0 0
  %374 = vmatpush1.bf16.msra.mxu0 %v345
  %375 = vmatprep.subr.bf16.mxu0 0
  %376 = vmatpush1.bf16.msra.mxu0 %v346
  %377 = vmatprep.subr.bf16.mxu0 0
  %378 = vmatpush1.bf16.msra.mxu0 %v347
  %379 = vmatprep.subr.bf16.mxu0 0
  %380 = vmatpush1.bf16.msra.mxu0 %v359
  %381 = vmatprep.subr.bf16.mxu0 0
  %382 = vmatpush1.bf16.msra.mxu0 0
  %383 = vmatprep.subr.bf16.mxu0 0
  %384 = vmatpush1.bf16.msra.mxu0 0
  %385 = vmatprep.subr.bf16.mxu0 0
  %386 = vmatpush1.bf16.msra.mxu0 0
  %387 = vmatprep.subr.bf16.mxu0 0
  %388 = vmatpush1.bf16.msra.mxu0 0
  %389 = vmatprep.subr.bf16.mxu0 0
  %390 = vmatpush1.bf16.msra.mxu0 0
  %391 = vmatprep.subr.bf16.mxu0 0
  %392 = vmatpush1.bf16.msra.mxu0 0
  %393 = vmatprep.mubr.bf16.mxu0 %v113
  %394 = vmatmul.mubr.bf16.gmra.mrb[0].mxu0 %v51
  %v395 = vpop.f32.mrb[0].mxu0
  %v396 = vadd.f32 0.0, %v395
  %v397 = vpop.f32.mrb[0].mxu0
  %v398 = vpop.f32.mrb[0].mxu0
  %v399 = vadd.f32 0.0, %v398
  %v400 = vpop.f32.mrb[0].mxu0
  %401 = vdwg.mxu0
  %v402 = vmax.f32 %v280, %v396
  %v403 = vmax.f32 %v281, %v399
  %v404 = vld [vmem:[%s5] sm:$0xf]
  %v405 = vld [vmem:[%s5 + $0x4] sm:$0xf]
  %v406 = vld [vmem:[%s5 + $0x8] sm:$0xf]
  %v407 = vld [vmem:[%s5 + $0xc] sm:$0xf]
  %v408 = vld [vmem:[%s5 + $0x10] sm:$0xf]
  %v409 = vld [vmem:[%s5 + $0x14] sm:$0xf]
  %v410 = vld [vmem:[%s5 + $0x18] sm:$0xf]
  %v411 = vld [vmem:[%s5 + $0x1c] sm:$0xf]
  %v412 = vld [vmem:[%s5 + $0x20] sm:$0xf]
  %v413 = vld [vmem:[%s5 + $0x24] sm:$0xf]
  %v414 = vld [vmem:[%s5 + $0x28] sm:$0xf]
  %v415 = vld [vmem:[%s5 + $0x2c] sm:$0xf]
  %v416 = vld [vmem:[%s5 + $0x30] sm:$0xf]
  %v417 = vld [vmem:[%s5 + $0x34] sm:$0xf]
  %v418 = vld [vmem:[%s5 + $0x38] sm:$0xf]
  %v419 = vld [vmem:[%s5 + $0x3c] sm:$0xf]
  %v420 = vld [vmem:[%s5 + $0x40] sm:$0xf]
  %v421 = vld [vmem:[%s5 + $0x44] sm:$0xf]
  %v422 = vld [vmem:[%s5 + $0x48] sm:$0x7]
  %v442 = vunpack.c.l.b16 %v404
  %v443 = vunpack.c.l.b16 %v405
  %v444 = vunpack.c.l.b16 %v406
  %v445 = vunpack.c.l.b16 %v407
  %v446 = vunpack.c.l.b16 %v408
  %v447 = vunpack.c.l.b16 %v409
  %v448 = vunpack.c.l.b16 %v410
  %v449 = vunpack.c.l.b16 %v411
  %v450 = vunpack.c.l.b16 %v412
  %v451 = vunpack.c.l.b16 %v413
  %v452 = vunpack.c.l.b16 %v414
  %v453 = vunpack.c.l.b16 %v415
  %v454 = vunpack.c.l.b16 %v416
  %v455 = vunpack.c.l.b16 %v417
  %v456 = vunpack.c.l.b16 %v418
  %v457 = vunpack.c.l.b16 %v419
  %v458 = vunpack.c.l.b16 %v420
  %v459 = vunpack.c.l.b16 %v421
  %v460 = vunpack.c.l.b16 %v422
  %v461 = vpack.c.b16 %v443, %v442
  %v462 = vpack.c.b16 %v445, %v444
  %v463 = vpack.c.b16 %v447, %v446
  %v464 = vpack.c.b16 %v449, %v448
  %v465 = vpack.c.b16 %v451, %v450
  %v466 = vpack.c.b16 %v453, %v452
  %v467 = vpack.c.b16 %v455, %v454
  %v468 = vpack.c.b16 %v457, %v456
  %v469 = vpack.c.b16 %v459, %v458
  %v470 = vpack.c.b16 %v460, %v460
  %v481 = vsel %vm115, %v470, 0
  %483 = vmatprep.subr.bf16.mxu0 0
  %484 = vmatpush1.bf16.msra.mxu0 %v461
  %485 = vmatprep.subr.bf16.mxu0 0
  %486 = vmatpush1.bf16.msra.mxu0 %v462
  %487 = vmatprep.subr.bf16.mxu0 0
  %488 = vmatpush1.bf16.msra.mxu0 %v463
  %489 = vmatprep.subr.bf16.mxu0 0
  %490 = vmatpush1.bf16.msra.mxu0 %v464
  %491 = vmatprep.subr.bf16.mxu0 0
  %492 = vmatpush1.bf16.msra.mxu0 %v465
  %493 = vmatprep.subr.bf16.mxu0 0
  %494 = vmatpush1.bf16.msra.mxu0 %v466
  %495 = vmatprep.subr.bf16.mxu0 0
  %496 = vmatpush1.bf16.msra.mxu0 %v467
  %497 = vmatprep.subr.bf16.mxu0 0
  %498 = vmatpush1.bf16.msra.mxu0 %v468
  %499 = vmatprep.subr.bf16.mxu0 0
  %500 = vmatpush1.bf16.msra.mxu0 %v469
  %501 = vmatprep.subr.bf16.mxu0 0
  %502 = vmatpush1.bf16.msra.mxu0 %v481
  %503 = vmatprep.subr.bf16.mxu0 0
  %504 = vmatpush1.bf16.msra.mxu0 0
  %505 = vmatprep.subr.bf16.mxu0 0
  %506 = vmatpush1.bf16.msra.mxu0 0
  %507 = vmatprep.subr.bf16.mxu0 0
  %508 = vmatpush1.bf16.msra.mxu0 0
  %509 = vmatprep.subr.bf16.mxu0 0
  %510 = vmatpush1.bf16.msra.mxu0 0
  %511 = vmatprep.subr.bf16.mxu0 0
  %512 = vmatpush1.bf16.msra.mxu0 0
  %513 = vmatprep.subr.bf16.mxu0 0
  %514 = vmatpush1.bf16.msra.mxu0 0
  %515 = vmatprep.mubr.bf16.mxu0 %v113
  %516 = vmatmul.mubr.bf16.gmra.mrb[0].mxu0 %v51
  %v517 = vpop.f32.mrb[0].mxu0
  %v518 = vadd.f32 0.0, %v517
  %v519 = vpop.f32.mrb[0].mxu0
  %v520 = vpop.f32.mrb[0].mxu0
  %v521 = vadd.f32 0.0, %v520
  %v522 = vpop.f32.mrb[0].mxu0
  %523 = vdwg.mxu0
  %v524 = vmax.f32 %v402, %v518
  %v525 = vmax.f32 %v403, %v521
  %v526 = vld [vmem:[%s1] sm:$0xff]
  %v527 = vld [vmem:[%s1 + $0x8] sm:$0xff]
  %529 = vset.pattern.permute.xlu0 0
  %530 = vperm.xlu0 %529, %v526
  %v531 = vpop.permute.xlu0 %530
  %534 = vset.pattern.permute.xlu0 0
  %535 = vperm.xlu0 %534, %v527
  %v536 = vpop.permute.xlu0 %535
  %v538 = vadd.f32 %v524, %v531
  %v539 = vadd.f32 %v525, %v536
  %v540 = vmax.f32 %v538, 0.0
  %v541 = vmax.f32 %v539, 0.0
  %v542 = vpack.c.bf16 %v541, %v540
  %v544 = vunpack.c.l.b16 %v542
  %v545 = vunpack.c.h.b16 %v542
  %v546 = vpack.c.b16 %v544, %v544
  %v547 = vpack.c.b16 %v545, %v545
  %550 = vst [vmem:[%s6] sm:$0xf] %v546
  %551 = vst [vmem:[%s6 + $0x4] sm:$0xf] %v547
  // Predicated region
  $region26: #{net_forward.4} parent=0 // pred_check
    _
  $region27: #{net_forward.4} parent=0 // pred_check_branch
    %553 = sbr.rel (0) target = $region29
  $region28: #{net_forward.4} parent=0 // pred_region
    _
  $region29: #{net_forward.4} parent=0 // pred_fallthru
    _
  // Predicated region
  $region30: #{net_forward.4} parent=0 // pred_check
    _
  $region31: #{net_forward.4} parent=0 // pred_check_branch
    %555 = sbr.rel (0) target = $region33
  $region32: #{net_forward.4} parent=0 // pred_region
    _
  $region33: #{net_forward.4} parent=0 // pred_fallthru
    _

// kernel: net_forward.5
$region0: #{net_forward.5}
  #allocation0 [shape = 'u32[]', space=smem, size = 0x4, offset = 0x4, fixed_abs, tag = 'smem constant byte address 0x4 - core index']
  #allocation1 [shape = 'u32[144,128]{1,0:T(1,128)}', space=vmem, size = 0x12000, scoped, tag = 'internal scratch']
  %s0 = inlined_call_operand.vmem [shape: bf16[400,128], index: 0, kind: input, shape index: {}]
  %s1 = inlined_call_operand.vmem [shape: bf16[128,400], index: 1, kind: input, shape index: {}]
  %s2 = inlined_call_operand.vmem [shape: f32[128,1], index: 2, kind: input, shape index: {}]
  %s3 = inlined_call_operand.vmem [shape: bf16[128,128], index: 3, kind: input, shape index: {}]
  %s4 = inlined_call_operand.vmem [shape: f32[128,1], index: 4, kind: input, shape index: {}]
  %s5 = inlined_call_operand.vmem [shape: bf16[16,128], index: 5, kind: input, shape index: {}]
  %s6 = inlined_call_operand.vmem [shape: f32[16,1], index: 6, kind: input, shape index: {}]
  %s7 = inlined_call_operand.vmem [shape: f32[16,128], index: 7, kind: output, shape index: {}]
  %s8 = sld [smem:[#allocation0]]
  $region38: #{net_forward.5} parent=0
    _
  %s10 = ssub.s32 1, %s8
  %s11 = scalar_select 0, %s10, %s8
  // Predicated region
  $region2: #{net_forward.5} parent=0 // pred_check
    _
  $region3: #{net_forward.5} parent=0 // pred_check_branch
    %13 = sbr.rel (0) target = $region5
  $region4: #{net_forward.5} parent=0 // pred_region
    _
  $region5: #{net_forward.5} parent=0 // pred_fallthru
    _
  // Predicated region
  $region6: #{net_forward.5} parent=0 // pred_check
    _
  $region7: #{net_forward.5} parent=0 // pred_check_branch
    %15 = sbr.rel (0) target = $region9
  $region8: #{net_forward.5} parent=0 // pred_region
    _
  $region9: #{net_forward.5} parent=0 // pred_fallthru
    _
  // Predicated region
  $region10: #{net_forward.5} parent=0 // pred_check
    _
  $region11: #{net_forward.5} parent=0 // pred_check_branch
    %17 = sbr.rel (0) target = $region13
  $region12: #{net_forward.5} parent=0 // pred_region
    _
  $region13: #{net_forward.5} parent=0 // pred_fallthru
    _
  // Predicated region
  $region14: #{net_forward.5} parent=0 // pred_check
    _
  $region15: #{net_forward.5} parent=0 // pred_check_branch
    %19 = sbr.rel (0) target = $region17
  $region16: #{net_forward.5} parent=0 // pred_region
    _
  $region17: #{net_forward.5} parent=0 // pred_fallthru
    _
  // Predicated region
  $region18: #{net_forward.5} parent=0 // pred_check
    _
  $region19: #{net_forward.5} parent=0 // pred_check_branch
    %21 = sbr.rel (0) target = $region21
  $region20: #{net_forward.5} parent=0 // pred_region
    _
  $region21: #{net_forward.5} parent=0 // pred_fallthru
    _
  // Predicated region
  $region22: #{net_forward.5} parent=0 // pred_check
    _
  $region23: #{net_forward.5} parent=0 // pred_check_branch
    %23 = sbr.rel (0) target = $region25
  $region24: #{net_forward.5} parent=0 // pred_region
    _
  $region25: #{net_forward.5} parent=0 // pred_fallthru
    _
  // Predicated region
  $region26: #{net_forward.5} parent=0 // pred_check
    _
  $region27: #{net_forward.5} parent=0 // pred_check_branch
    %25 = sbr.rel (0) target = $region29
  $region28: #{net_forward.5} parent=0 // pred_region
    _
  $region29: #{net_forward.5} parent=0 // pred_fallthru
    _
  %v27 = vld [vmem:[%s1] sm:$0xff]
  %v28 = vld [vmem:[%s1 + $0x8] sm:$0xff]
  %v29 = vld [vmem:[%s1 + $0x10] sm:$0xff]
  %v30 = vld [vmem:[%s1 + $0x18] sm:$0xff]
  %v31 = vld [vmem:[%s1 + $0x20] sm:$0xff]
  %v32 = vld [vmem:[%s1 + $0x28] sm:$0xff]
  %v33 = vld [vmem:[%s1 + $0x30] sm:$0xff]
  %v34 = vld [vmem:[%s1 + $0x38] sm:$0xff]
  %v35 = vld [vmem:[%s1 + $0x40] sm:$0xff]
  %v36 = vld [vmem:[%s1 + $0x48] sm:$0xff]
  %v37 = vld [vmem:[%s1 + $0x50] sm:$0xff]
  %v38 = vld [vmem:[%s1 + $0x58] sm:$0xff]
  %v39 = vld [vmem:[%s1 + $0x60] sm:$0xff]
  %v40 = vld [vmem:[%s1 + $0x68] sm:$0xff]
  %v41 = vld [vmem:[%s1 + $0x70] sm:$0xff]
  %v42 = vld [vmem:[%s1 + $0x78] sm:$0xff]
  %v43 = vld [vmem:[%s1 + $0x80] sm:$0xff]
  %v44 = vld [vmem:[%s1 + $0x88] sm:$0xff]
  %v45 = vld [vmem:[%s1 + $0x90] sm:$0xff]
  %v46 = vld [vmem:[%s1 + $0x98] sm:$0xff]
  %v47 = vld [vmem:[%s1 + $0xa0] sm:$0xff]
  %v48 = vld [vmem:[%s1 + $0xa8] sm:$0xff]
  %v49 = vld [vmem:[%s1 + $0xb0] sm:$0xff]
  %v50 = vld [vmem:[%s1 + $0xb8] sm:$0xff]
  %v51 = vld [vmem:[%s1 + $0xc0] sm:$0xff]
  %v52 = vld [vmem:[%s1 + $0xc8] sm:$0xff]
  %v53 = vld [vmem:[%s1 + $0xd0] sm:$0xff]
  %v54 = vld [vmem:[%s1 + $0xd8] sm:$0xff]
  %v55 = vld [vmem:[%s1 + $0xe0] sm:$0xff]
  %v56 = vld [vmem:[%s1 + $0xe8] sm:$0xff]
  %v57 = vld [vmem:[%s1 + $0xf0] sm:$0xff]
  %v58 = vld [vmem:[%s1 + $0xf8] sm:$0xff]
  %v59 = vld [vmem:[%s0] sm:$0xf]
  %v60 = vld [vmem:[%s0 + $0x4] sm:$0xf]
  %v61 = vld [vmem:[%s0 + $0x8] sm:$0xf]
  %v62 = vld [vmem:[%s0 + $0xc] sm:$0xf]
  %v63 = vld [vmem:[%s0 + $0x10] sm:$0xf]
  %v64 = vld [vmem:[%s0 + $0x14] sm:$0xf]
  %v65 = vld [vmem:[%s0 + $0x18] sm:$0xf]
  %v66 = vld [vmem:[%s0 + $0x1c] sm:$0xf]
  %v67 = vld [vmem:[%s0 + $0x20] sm:$0xf]
  %v68 = vld [vmem:[%s0 + $0x24] sm:$0xf]
  %v69 = vld [vmem:[%s0 + $0x28] sm:$0xf]
  %v70 = vld [vmem:[%s0 + $0x2c] sm:$0xf]
  %v71 = vld [vmem:[%s0 + $0x30] sm:$0xf]
  %v72 = vld [vmem:[%s0 + $0x34] sm:$0xf]
  %v73 = vld [vmem:[%s0 + $0x38] sm:$0xf]
  %v74 = vld [vmem:[%s0 + $0x3c] sm:$0xf]
  %v75 = vld [vmem:[%s0 + $0x40] sm:$0xf]
  %v76 = vld [vmem:[%s0 + $0x44] sm:$0xf]
  %v77 = vld [vmem:[%s0 + $0x48] sm:$0xf]
  %v78 = vld [vmem:[%s0 + $0x4c] sm:$0xf]
  %v79 = vld [vmem:[%s0 + $0x50] sm:$0xf]
  %v80 = vld [vmem:[%s0 + $0x54] sm:$0xf]
  %v81 = vld [vmem:[%s0 + $0x58] sm:$0xf]
  %v82 = vld [vmem:[%s0 + $0x5c] sm:$0xf]
  %v83 = vld [vmem:[%s0 + $0x60] sm:$0xf]
  %v84 = vld [vmem:[%s0 + $0x64] sm:$0xf]
  %v85 = vld [vmem:[%s0 + $0x68] sm:$0xf]
  %v86 = vld [vmem:[%s0 + $0x6c] sm:$0xf]
  %v87 = vld [vmem:[%s0 + $0x70] sm:$0xf]
  %v88 = vld [vmem:[%s0 + $0x74] sm:$0xf]
  %v89 = vld [vmem:[%s0 + $0x78] sm:$0xf]
  %v90 = vld [vmem:[%s0 + $0x7c] sm:$0xf]
  %v91 = vld [vmem:[%s0 + $0x80] sm:$0xf]
  %v92 = vld [vmem:[%s0 + $0x84] sm:$0xf]
  %v93 = vld [vmem:[%s0 + $0x88] sm:$0xf]
  %v94 = vld [vmem:[%s0 + $0x8c] sm:$0xf]
  %v95 = vld [vmem:[%s0 + $0x90] sm:$0xf]
  %v96 = vld [vmem:[%s0 + $0x94] sm:$0xf]
  %v97 = vld [vmem:[%s0 + $0x98] sm:$0xf]
  %v98 = vld [vmem:[%s0 + $0x9c] sm:$0xf]
  %v99 = vld [vmem:[%s0 + $0xa0] sm:$0xf]
  %v100 = vld [vmem:[%s0 + $0xa4] sm:$0xf]
  %v101 = vld [vmem:[%s0 + $0xa8] sm:$0xf]
  %v102 = vld [vmem:[%s0 + $0xac] sm:$0xf]
  %v103 = vld [vmem:[%s0 + $0xb0] sm:$0xf]
  %v104 = vld [vmem:[%s0 + $0xb4] sm:$0xf]
  %v105 = vld [vmem:[%s0 + $0xb8] sm:$0xf]
  %v106 = vld [vmem:[%s0 + $0xbc] sm:$0xf]
  %v107 = vld [vmem:[%s0 + $0xc0] sm:$0xf]
  %v108 = vld [vmem:[%s0 + $0xc4] sm:$0xf]
  %v109 = vld [vmem:[%s2] sm:$0xff]
  %v110 = vld [vmem:[%s2 + $0x8] sm:$0xff]
  %v111 = vld [vmem:[%s2 + $0x10] sm:$0xff]
  %v112 = vld [vmem:[%s2 + $0x18] sm:$0xff]
  %v113 = vld [vmem:[%s2 + $0x20] sm:$0xff]
  %v114 = vld [vmem:[%s2 + $0x28] sm:$0xff]
  %v115 = vld [vmem:[%s2 + $0x30] sm:$0xff]
  %v116 = vld [vmem:[%s2 + $0x38] sm:$0xff]
  %v117 = vld [vmem:[%s2 + $0x40] sm:$0xff]
  %v118 = vld [vmem:[%s2 + $0x48] sm:$0xff]
  %v119 = vld [vmem:[%s2 + $0x50] sm:$0xff]
  %v120 = vld [vmem:[%s2 + $0x58] sm:$0xff]
  %v121 = vld [vmem:[%s2 + $0x60] sm:$0xff]
  %v122 = vld [vmem:[%s2 + $0x68] sm:$0xff]
  %v123 = vld [vmem:[%s2 + $0x70] sm:$0xff]
  %v124 = vld [vmem:[%s2 + $0x78] sm:$0xff]
  %126 = vset.pattern.permute.xlu0 0
  %127 = vperm.xlu0 %126, %v109
  %v128 = vpop.permute.xlu0 %127
  %131 = vset.pattern.permute.xlu0 0
  %132 = vperm.xlu0 %131, %v110
  %v133 = vpop.permute.xlu0 %132
  %136 = vset.pattern.permute.xlu0 0
  %137 = vperm.xlu0 %136, %v111
  %v138 = vpop.permute.xlu0 %137
  %141 = vset.pattern.permute.xlu0 0
  %142 = vperm.xlu0 %141, %v112
  %v143 = vpop.permute.xlu0 %142
  %146 = vset.pattern.permute.xlu0 0
  %147 = vperm.xlu0 %146, %v113
  %v148 = vpop.permute.xlu0 %147
  %151 = vset.pattern.permute.xlu0 0
  %152 = vperm.xlu0 %151, %v114
  %v153 = vpop.permute.xlu0 %152
  %156 = vset.pattern.permute.xlu0 0
  %157 = vperm.xlu0 %156, %v115
  %v158 = vpop.permute.xlu0 %157
  %161 = vset.pattern.permute.xlu0 0
  %162 = vperm.xlu0 %161, %v116
  %v163 = vpop.permute.xlu0 %162
  %166 = vset.pattern.permute.xlu0 0
  %167 = vperm.xlu0 %166, %v117
  %v168 = vpop.permute.xlu0 %167
  %171 = vset.pattern.permute.xlu0 0
  %172 = vperm.xlu0 %171, %v118
  %v173 = vpop.permute.xlu0 %172
  %176 = vset.pattern.permute.xlu0 0
  %177 = vperm.xlu0 %176, %v119
  %v178 = vpop.permute.xlu0 %177
  %181 = vset.pattern.permute.xlu0 0
  %182 = vperm.xlu0 %181, %v120
  %v183 = vpop.permute.xlu0 %182
  %186 = vset.pattern.permute.xlu0 0
  %187 = vperm.xlu0 %186, %v121
  %v188 = vpop.permute.xlu0 %187
  %191 = vset.pattern.permute.xlu0 0
  %192 = vperm.xlu0 %191, %v122
  %v193 = vpop.permute.xlu0 %192
  %196 = vset.pattern.permute.xlu0 0
  %197 = vperm.xlu0 %196, %v123
  %v198 = vpop.permute.xlu0 %197
  %201 = vset.pattern.permute.xlu0 0
  %202 = vperm.xlu0 %201, %v124
  %v203 = vpop.permute.xlu0 %202
  %v237 = vunpack.c.l.b16 %v27
  %v238 = vunpack.c.h.b16 %v27
  %v239 = vunpack.c.l.b16 %v28
  %v240 = vunpack.c.h.b16 %v28
  %v241 = vunpack.c.l.b16 %v29
  %v242 = vunpack.c.h.b16 %v29
  %v243 = vunpack.c.l.b16 %v30
  %v244 = vunpack.c.h.b16 %v30
  %v245 = vunpack.c.l.b16 %v31
  %v246 = vunpack.c.h.b16 %v31
  %v247 = vunpack.c.l.b16 %v32
  %v248 = vunpack.c.h.b16 %v32
  %v249 = vunpack.c.l.b16 %v33
  %v250 = vunpack.c.h.b16 %v33
  %v251 = vunpack.c.l.b16 %v34
  %v252 = vunpack.c.h.b16 %v34
  %v253 = vunpack.c.l.b16 %v35
  %v254 = vunpack.c.h.b16 %v35
  %v255 = vunpack.c.l.b16 %v36
  %v256 = vunpack.c.h.b16 %v36
  %v257 = vunpack.c.l.b16 %v37
  %v258 = vunpack.c.h.b16 %v37
  %v259 = vunpack.c.l.b16 %v38
  %v260 = vunpack.c.h.b16 %v38
  %v261 = vunpack.c.l.b16 %v39
  %v262 = vunpack.c.h.b16 %v39
  %v263 = vunpack.c.l.b16 %v40
  %v264 = vunpack.c.h.b16 %v40
  %v265 = vunpack.c.l.b16 %v41
  %v266 = vunpack.c.h.b16 %v41
  %v267 = vunpack.c.l.b16 %v42
  %v268 = vunpack.c.h.b16 %v42
  %v269 = vunpack.c.l.b16 %v43
  %v270 = vunpack.c.h.b16 %v43
  %v271 = vunpack.c.l.b16 %v44
  %v272 = vunpack.c.h.b16 %v44
  %v273 = vunpack.c.l.b16 %v45
  %v274 = vunpack.c.h.b16 %v45
  %v275 = vunpack.c.l.b16 %v46
  %v276 = vunpack.c.h.b16 %v46
  %v277 = vunpack.c.l.b16 %v47
  %v278 = vunpack.c.h.b16 %v47
  %v279 = vunpack.c.l.b16 %v48
  %v280 = vunpack.c.h.b16 %v48
  %v281 = vunpack.c.l.b16 %v49
  %v282 = vunpack.c.h.b16 %v49
  %v283 = vunpack.c.l.b16 %v50
  %v284 = vunpack.c.h.b16 %v50
  %v285 = vunpack.c.l.b16 %v51
  %v286 = vunpack.c.h.b16 %v51
  %v287 = vunpack.c.l.b16 %v52
  %v288 = vunpack.c.h.b16 %v52
  %v289 = vunpack.c.l.b16 %v53
  %v290 = vunpack.c.h.b16 %v53
  %v291 = vunpack.c.l.b16 %v54
  %v292 = vunpack.c.h.b16 %v54
  %v293 = vunpack.c.l.b16 %v55
  %v294 = vunpack.c.h.b16 %v55
  %v295 = vunpack.c.l.b16 %v56
  %v296 = vunpack.c.h.b16 %v56
  %v297 = vunpack.c.l.b16 %v57
  %v298 = vunpack.c.h.b16 %v57
  %v299 = vunpack.c.l.b16 %v58
  %v300 = vunpack.c.h.b16 %v58
  %v301 = vpack.c.b16 %v241, %v237
  %v302 = vpack.c.b16 %v242, %v238
  %v303 = vpack.c.b16 %v243, %v239
  %v304 = vpack.c.b16 %v244, %v240
  %v305 = vpack.c.b16 %v249, %v245
  %v306 = vpack.c.b16 %v250, %v246
  %v307 = vpack.c.b16 %v251, %v247
  %v308 = vpack.c.b16 %v252, %v248
  %v309 = vpack.c.b16 %v257, %v253
  %v310 = vpack.c.b16 %v258, %v254
  %v311 = vpack.c.b16 %v259, %v255
  %v312 = vpack.c.b16 %v260, %v256
  %v313 = vpack.c.b16 %v265, %v261
  %v314 = vpack.c.b16 %v266, %v262
  %v315 = vpack.c.b16 %v267, %v263
  %v316 = vpack.c.b16 %v268, %v264
  %v317 = vpack.c.b16 %v273, %v269
  %v318 = vpack.c.b16 %v274, %v270
  %v319 = vpack.c.b16 %v275, %v271
  %v320 = vpack.c.b16 %v276, %v272
  %v321 = vpack.c.b16 %v281, %v277
  %v322 = vpack.c.b16 %v282, %v278
  %v323 = vpack.c.b16 %v283, %v279
  %v324 = vpack.c.b16 %v284, %v280
  %v325 = vpack.c.b16 %v289, %v285
  %v326 = vpack.c.b16 %v290, %v286
  %v327 = vpack.c.b16 %v291, %v287
  %v328 = vpack.c.b16 %v292, %v288
  %v329 = vpack.c.b16 %v297, %v293
  %v330 = vpack.c.b16 %v298, %v294
  %v331 = vpack.c.b16 %v299, %v295
  %v332 = vpack.c.b16 %v300, %v296
  %v407 = vunpack.c.l.b16 %v59
  %v408 = vunpack.c.l.b16 %v60
  %v409 = vunpack.c.l.b16 %v61
  %v410 = vunpack.c.l.b16 %v62
  %v411 = vunpack.c.l.b16 %v63
  %v412 = vunpack.c.l.b16 %v64
  %v413 = vunpack.c.l.b16 %v65
  %v414 = vunpack.c.l.b16 %v66
  %v415 = vunpack.c.l.b16 %v67
  %v416 = vunpack.c.l.b16 %v68
  %v417 = vunpack.c.l.b16 %v69
  %v418 = vunpack.c.l.b16 %v70
  %v419 = vunpack.c.l.b16 %v71
  %v420 = vunpack.c.l.b16 %v72
  %v421 = vunpack.c.l.b16 %v73
  %v422 = vunpack.c.l.b16 %v74
  %v423 = vunpack.c.l.b16 %v75
  %v424 = vunpack.c.l.b16 %v76
  %v425 = vunpack.c.l.b16 %v77
  %v426 = vunpack.c.l.b16 %v78
  %v427 = vunpack.c.l.b16 %v79
  %v428 = vunpack.c.l.b16 %v80
  %v429 = vunpack.c.l.b16 %v81
  %v430 = vunpack.c.l.b16 %v82
  %v431 = vunpack.c.l.b16 %v83
  %v432 = vunpack.c.l.b16 %v84
  %v433 = vunpack.c.l.b16 %v85
  %v434 = vunpack.c.l.b16 %v86
  %v435 = vunpack.c.l.b16 %v87
  %v436 = vunpack.c.l.b16 %v88
  %v437 = vunpack.c.l.b16 %v89
  %v438 = vunpack.c.l.b16 %v90
  %v439 = vunpack.c.l.b16 %v91
  %v440 = vunpack.c.l.b16 %v92
  %v441 = vunpack.c.l.b16 %v93
  %v442 = vunpack.c.l.b16 %v94
  %v443 = vunpack.c.l.b16 %v95
  %v444 = vunpack.c.l.b16 %v96
  %v445 = vunpack.c.l.b16 %v97
  %v446 = vunpack.c.l.b16 %v98
  %v447 = vunpack.c.l.b16 %v99
  %v448 = vunpack.c.l.b16 %v100
  %v449 = vunpack.c.l.b16 %v101
  %v450 = vunpack.c.l.b16 %v102
  %v451 = vunpack.c.l.b16 %v103
  %v452 = vunpack.c.l.b16 %v104
  %v453 = vunpack.c.l.b16 %v105
  %v454 = vunpack.c.l.b16 %v106
  %v455 = vunpack.c.l.b16 %v107
  %v456 = vunpack.c.l.b16 %v108
  %v457 = vpack.c.b16 %v408, %v407
  %v458 = vpack.c.b16 %v410, %v409
  %v459 = vpack.c.b16 %v412, %v411
  %v460 = vpack.c.b16 %v414, %v413
  %v461 = vpack.c.b16 %v416, %v415
  %v462 = vpack.c.b16 %v418, %v417
  %v463 = vpack.c.b16 %v420, %v419
  %v464 = vpack.c.b16 %v422, %v421
  %v465 = vpack.c.b16 %v424, %v423
  %v466 = vpack.c.b16 %v426, %v425
  %v467 = vpack.c.b16 %v428, %v427
  %v468 = vpack.c.b16 %v430, %v429
  %v469 = vpack.c.b16 %v432, %v431
  %v470 = vpack.c.b16 %v434, %v433
  %v471 = vpack.c.b16 %v436, %v435
  %v472 = vpack.c.b16 %v438, %v437
  %v473 = vpack.c.b16 %v440, %v439
  %v474 = vpack.c.b16 %v442, %v441
  %v475 = vpack.c.b16 %v444, %v443
  %v476 = vpack.c.b16 %v446, %v445
  %v477 = vpack.c.b16 %v448, %v447
  %v478 = vpack.c.b16 %v450, %v449
  %v479 = vpack.c.b16 %v452, %v451
  %v480 = vpack.c.b16 %v454, %v453
  %v481 = vpack.c.b16 %v456, %v455
  %vm507 = vcmask 130048
  %v509 = vsel %vm507, %v304, 0
  %v512 = vsel %vm507, %v308, 0
  %v515 = vsel %vm507, %v312, 0
  %v518 = vsel %vm507, %v316, 0
  %v521 = vsel %vm507, %v320, 0
  %v524 = vsel %vm507, %v324, 0
  %v527 = vsel %vm507, %v328, 0
  %v530 = vsel %vm507, %v332, 0
  %532 = vmatprep.subr.bf16.mxu0 0
  %533 = vmatpush1.bf16.msra.mxu0 %v457
  %534 = vmatprep.subr.bf16.mxu0 0
  %535 = vmatpush1.bf16.msra.mxu0 %v458
  %536 = vmatprep.subr.bf16.mxu0 0
  %537 = vmatpush1.bf16.msra.mxu0 %v459
  %538 = vmatprep.subr.bf16.mxu0 0
  %539 = vmatpush1.bf16.msra.mxu0 %v460
  %540 = vmatprep.subr.bf16.mxu0 0
  %541 = vmatpush1.bf16.msra.mxu0 %v461
  %542 = vmatprep.subr.bf16.mxu0 0
  %543 = vmatpush1.bf16.msra.mxu0 %v462
  %544 = vmatprep.subr.bf16.mxu0 0
  %545 = vmatpush1.bf16.msra.mxu0 %v463
  %546 = vmatprep.subr.bf16.mxu0 0
  %547 = vmatpush1.bf16.msra.mxu0 %v464
  %548 = vmatprep.subr.bf16.mxu0 0
  %549 = vmatpush1.bf16.msra.mxu0 %v465
  %550 = vmatprep.subr.bf16.mxu0 0
  %551 = vmatpush1.bf16.msra.mxu0 %v466
  %552 = vmatprep.subr.bf16.mxu0 0
  %553 = vmatpush1.bf16.msra.mxu0 %v467
  %554 = vmatprep.subr.bf16.mxu0 0
  %555 = vmatpush1.bf16.msra.mxu0 %v468
  %556 = vmatprep.subr.bf16.mxu0 0
  %557 = vmatpush1.bf16.msra.mxu0 %v469
  %558 = vmatprep.subr.bf16.mxu0 0
  %559 = vmatpush1.bf16.msra.mxu0 %v470
  %560 = vmatprep.subr.bf16.mxu0 0
  %561 = vmatpush1.bf16.msra.mxu0 %v471
  %562 = vmatprep.subr.bf16.mxu0 0
  %563 = vmatpush1.bf16.msra.mxu0 %v472
  %564 = vmatprep.mubr.bf16.mxu0 %v302
  %565 = vmatmul.mubr.bf16.gmra.mrb[0].mxu0 %v301
  %v566 = vpop.f32.mrb[0].mxu0
  %v567 = vadd.f32 %v128, %v566
  %v568 = vpop.f32.mrb[0].mxu0
  %v569 = vpop.f32.mrb[0].mxu0
  %v570 = vadd.f32 %v133, %v569
  %v571 = vpop.f32.mrb[0].mxu0
  %572 = vmatprep.mubr.bf16.mxu0 %v306
  %573 = vmatmul.mubr.bf16.gmra.mrb[0].mxu0 %v305
  %v574 = vpop.f32.mrb[0].mxu0
  %v575 = vadd.f32 %v138, %v574
  %v576 = vpop.f32.mrb[0].mxu0
  %v577 = vpop.f32.mrb[0].mxu0
  %v578 = vadd.f32 %v143, %v577
  %v579 = vpop.f32.mrb[0].mxu0
  %580 = vmatprep.mubr.bf16.mxu0 %v310
  %581 = vmatmul.mubr.bf16.gmra.mrb[0].mxu0 %v309
  %v582 = vpop.f32.mrb[0].mxu0
  %v583 = vadd.f32 %v148, %v582
  %v584 = vpop.f32.mrb[0].mxu0
  %v585 = vpop.f32.mrb[0].mxu0
  %v586 = vadd.f32 %v153, %v585
  %v587 = vpop.f32.mrb[0].mxu0
  %588 = vmatprep.mubr.bf16.mxu0 %v314
  %589 = vmatmul.mubr.bf16.gmra.mrb[0].mxu0 %v313
  %v590 = vpop.f32.mrb[0].mxu0
  %v591 = vadd.f32 %v158, %v590
  %v592 = vpop.f32.mrb[0].mxu0
  %v593 = vpop.f32.mrb[0].mxu0
  %v594 = vadd.f32 %v163, %v593
  %v595 = vpop.f32.mrb[0].mxu0
  %596 = vmatprep.mubr.bf16.mxu0 %v318
  %597 = vmatmul.mubr.bf16.gmra.mrb[0].mxu0 %v317
  %v598 = vpop.f32.mrb[0].mxu0
  %v599 = vadd.f32 %v168, %v598
  %v600 = vpop.f32.mrb[0].mxu0
  %v601 = vpop.f32.mrb[0].mxu0
  %v602 = vadd.f32 %v173, %v601
  %v603 = vpop.f32.mrb[0].mxu0
  %604 = vmatprep.mubr.bf16.mxu0 %v322
  %605 = vmatmul.mubr.bf16.gmra.mrb[0].mxu0 %v321
  %v606 = vpop.f32.mrb[0].mxu0
  %v607 = vadd.f32 %v178, %v606
  %v608 = vpop.f32.mrb[0].mxu0
  %v609 = vpop.f32.mrb[0].mxu0
  %v610 = vadd.f32 %v183, %v609
  %v611 = vpop.f32.mrb[0].mxu0
  %612 = vmatprep.mubr.bf16.mxu0 %v326
  %613 = vmatmul.mubr.bf16.gmra.mrb[0].mxu0 %v325
  %v614 = vpop.f32.mrb[0].mxu0
  %v615 = vadd.f32 %v188, %v614
  %v616 = vpop.f32.mrb[0].mxu0
  %v617 = vpop.f32.mrb[0].mxu0
  %v618 = vadd.f32 %v193, %v617
  %v619 = vpop.f32.mrb[0].mxu0
  %620 = vmatprep.mubr.bf16.mxu0 %v330
  %621 = vmatmul.mubr.bf16.gmra.mrb[0].mxu0 %v329
  %v622 = vpop.f32.mrb[0].mxu0
  %v623 = vadd.f32 %v198, %v622
  %v624 = vpop.f32.mrb[0].mxu0
  %v625 = vpop.f32.mrb[0].mxu0
  %v626 = vadd.f32 %v203, %v625
  %v627 = vpop.f32.mrb[0].mxu0
  %628 = vdwg.mxu0
  %629 = vmatprep.subr.bf16.mxu0 0
  %630 = vmatpush1.bf16.msra.mxu0 %v473
  %631 = vmatprep.subr.bf16.mxu0 0
  %632 = vmatpush1.bf16.msra.mxu0 %v474
  %633 = vmatprep.subr.bf16.mxu0 0
  %634 = vmatpush1.bf16.msra.mxu0 %v475
  %635 = vmatprep.subr.bf16.mxu0 0
  %636 = vmatpush1.bf16.msra.mxu0 %v476
  %637 = vmatprep.subr.bf16.mxu0 0
  %638 = vmatpush1.bf16.msra.mxu0 %v477
  %639 = vmatprep.subr.bf16.mxu0 0
  %640 = vmatpush1.bf16.msra.mxu0 %v478
  %641 = vmatprep.subr.bf16.mxu0 0
  %642 = vmatpush1.bf16.msra.mxu0 %v479
  %643 = vmatprep.subr.bf16.mxu0 0
  %644 = vmatpush1.bf16.msra.mxu0 %v480
  %645 = vmatprep.subr.bf16.mxu0 0
  %646 = vmatpush1.bf16.msra.mxu0 %v481
  %647 = vmatprep.subr.bf16.mxu0 0
  %648 = vmatpush1.bf16.msra.mxu0 0
  %649 = vmatprep.subr.bf16.mxu0 0
  %650 = vmatpush1.bf16.msra.mxu0 0
  %651 = vmatprep.subr.bf16.mxu0 0
  %652 = vmatpush1.bf16.msra.mxu0 0
  %653 = vmatprep.subr.bf16.mxu0 0
  %654 = vmatpush1.bf16.msra.mxu0 0
  %655 = vmatprep.subr.bf16.mxu0 0
  %656 = vmatpush1.bf16.msra.mxu0 0
  %657 = vmatprep.subr.bf16.mxu0 0
  %658 = vmatpush1.bf16.msra.mxu0 0
  %659 = vmatprep.subr.bf16.mxu0 0
  %660 = vmatpush1.bf16.msra.mxu0 0
  %661 = vmatprep.mubr.bf16.mxu0 %v509
  %662 = vmatmul.mubr.bf16.gmra.mrb[0].mxu0 %v303
  %v663 = vpop.f32.mrb[0].mxu0
  %v664 = vadd.f32 %v567, %v663
  %v665 = vpop.f32.mrb[0].mxu0
  %v666 = vpop.f32.mrb[0].mxu0
  %v667 = vadd.f32 %v570, %v666
  %v668 = vpop.f32.mrb[0].mxu0
  %669 = vmatprep.mubr.bf16.mxu0 %v512
  %670 = vmatmul.mubr.bf16.gmra.mrb[0].mxu0 %v307
  %v671 = vpop.f32.mrb[0].mxu0
  %v672 = vadd.f32 %v575, %v671
  %v673 = vpop.f32.mrb[0].mxu0
  %v674 = vpop.f32.mrb[0].mxu0
  %v675 = vadd.f32 %v578, %v674
  %v676 = vpop.f32.mrb[0].mxu0
  %677 = vmatprep.mubr.bf16.mxu0 %v515
  %678 = vmatmul.mubr.bf16.gmra.mrb[0].mxu0 %v311
  %v679 = vpop.f32.mrb[0].mxu0
  %v680 = vadd.f32 %v583, %v679
  %v681 = vpop.f32.mrb[0].mxu0
  %v682 = vpop.f32.mrb[0].mxu0
  %v683 = vadd.f32 %v586, %v682
  %v684 = vpop.f32.mrb[0].mxu0
  %685 = vmatprep.mubr.bf16.mxu0 %v518
  %686 = vmatmul.mubr.bf16.gmra.mrb[0].mxu0 %v315
  %v687 = vpop.f32.mrb[0].mxu0
  %v688 = vadd.f32 %v591, %v687
  %v689 = vpop.f32.mrb[0].mxu0
  %v690 = vpop.f32.mrb[0].mxu0
  %v691 = vadd.f32 %v594, %v690
  %v692 = vpop.f32.mrb[0].mxu0
  %693 = vmatprep.mubr.bf16.mxu0 %v521
  %694 = vmatmul.mubr.bf16.gmra.mrb[0].mxu0 %v319
  %v695 = vpop.f32.mrb[0].mxu0
  %v696 = vadd.f32 %v599, %v695
  %v697 = vpop.f32.mrb[0].mxu0
  %v698 = vpop.f32.mrb[0].mxu0
  %v699 = vadd.f32 %v602, %v698
  %v700 = vpop.f32.mrb[0].mxu0
  %701 = vmatprep.mubr.bf16.mxu0 %v524
  %702 = vmatmul.mubr.bf16.gmra.mrb[0].mxu0 %v323
  %v703 = vpop.f32.mrb[0].mxu0
  %v704 = vadd.f32 %v607, %v703
  %v705 = vpop.f32.mrb[0].mxu0
  %v706 = vpop.f32.mrb[0].mxu0
  %v707 = vadd.f32 %v610, %v706
  %v708 = vpop.f32.mrb[0].mxu0
  %709 = vmatprep.mubr.bf16.mxu0 %v527
  %710 = vmatmul.mubr.bf16.gmra.mrb[0].mxu0 %v327
  %v711 = vpop.f32.mrb[0].mxu0
  %v712 = vadd.f32 %v615, %v711
  %v713 = vpop.f32.mrb[0].mxu0
  %v714 = vpop.f32.mrb[0].mxu0
  %v715 = vadd.f32 %v618, %v714
  %v716 = vpop.f32.mrb[0].mxu0
  %717 = vmatprep.mubr.bf16.mxu0 %v530
  %718 = vmatmul.mubr.bf16.gmra.mrb[0].mxu0 %v331
  %v719 = vpop.f32.mrb[0].mxu0
  %v720 = vadd.f32 %v623, %v719
  %v721 = vpop.f32.mrb[0].mxu0
  %v722 = vpop.f32.mrb[0].mxu0
  %v723 = vadd.f32 %v626, %v722
  %v724 = vpop.f32.mrb[0].mxu0
  %725 = vdwg.mxu0
  %v726 = vmax.f32 %v664, 0.0
  %v727 = vmax.f32 %v667, 0.0
  %v728 = vmax.f32 %v672, 0.0
  %v729 = vmax.f32 %v675, 0.0
  %v730 = vmax.f32 %v680, 0.0
  %v731 = vmax.f32 %v683, 0.0
  %v732 = vmax.f32 %v688, 0.0
  %v733 = vmax.f32 %v691, 0.0
  %v734 = vmax.f32 %v696, 0.0
  %v735 = vmax.f32 %v699, 0.0
  %v736 = vmax.f32 %v704, 0.0
  %v737 = vmax.f32 %v707, 0.0
  %v738 = vmax.f32 %v712, 0.0
  %v739 = vmax.f32 %v715, 0.0
  %v740 = vmax.f32 %v720, 0.0
  %v741 = vmax.f32 %v723, 0.0
  %v742 = vld [vmem:[%s3] sm:$0xf]
  %v743 = vld [vmem:[%s3 + $0x4] sm:$0xf]
  %v744 = vld [vmem:[%s3 + $0x8] sm:$0xf]
  %v745 = vld [vmem:[%s3 + $0xc] sm:$0xf]
  %v746 = vld [vmem:[%s3 + $0x10] sm:$0xf]
  %v747 = vld [vmem:[%s3 + $0x14] sm:$0xf]
  %v748 = vld [vmem:[%s3 + $0x18] sm:$0xf]
  %v749 = vld [vmem:[%s3 + $0x1c] sm:$0xf]
  %v750 = vld [vmem:[%s3 + $0x20] sm:$0xf]
  %v751 = vld [vmem:[%s3 + $0x24] sm:$0xf]
  %v752 = vld [vmem:[%s3 + $0x28] sm:$0xf]
  %v753 = vld [vmem:[%s3 + $0x2c] sm:$0xf]
  %v754 = vld [vmem:[%s3 + $0x30] sm:$0xf]
  %v755 = vld [vmem:[%s3 + $0x34] sm:$0xf]
  %v756 = vld [vmem:[%s3 + $0x38] sm:$0xf]
  %v757 = vld [vmem:[%s3 + $0x3c] sm:$0xf]
  %v758 = vpack.c.bf16 %v727, %v726
  %v759 = vpack.c.bf16 %v729, %v728
  %v760 = vpack.c.bf16 %v731, %v730
  %v761 = vpack.c.bf16 %v733, %v732
  %v762 = vpack.c.bf16 %v735, %v734
  %v763 = vpack.c.bf16 %v737, %v736
  %v764 = vpack.c.bf16 %v739, %v738
  %v765 = vpack.c.bf16 %v741, %v740
  %v766 = vld [vmem:[%s4] sm:$0xff]
  %v767 = vld [vmem:[%s4 + $0x8] sm:$0xff]
  %v768 = vld [vmem:[%s4 + $0x10] sm:$0xff]
  %v769 = vld [vmem:[%s4 + $0x18] sm:$0xff]
  %v770 = vld [vmem:[%s4 + $0x20] sm:$0xff]
  %v771 = vld [vmem:[%s4 + $0x28] sm:$0xff]
  %v772 = vld [vmem:[%s4 + $0x30] sm:$0xff]
  %v773 = vld [vmem:[%s4 + $0x38] sm:$0xff]
  %v774 = vld [vmem:[%s4 + $0x40] sm:$0xff]
  %v775 = vld [vmem:[%s4 + $0x48] sm:$0xff]
  %v776 = vld [vmem:[%s4 + $0x50] sm:$0xff]
  %v777 = vld [vmem:[%s4 + $0x58] sm:$0xff]
  %v778 = vld [vmem:[%s4 + $0x60] sm:$0xff]
  %v779 = vld [vmem:[%s4 + $0x68] sm:$0xff]
  %v780 = vld [vmem:[%s4 + $0x70] sm:$0xff]
  %v781 = vld [vmem:[%s4 + $0x78] sm:$0xff]
  %783 = vset.pattern.permute.xlu0 0
  %784 = vperm.xlu0 %783, %v766
  %v785 = vpop.permute.xlu0 %784
  %788 = vset.pattern.permute.xlu0 0
  %789 = vperm.xlu0 %788, %v767
  %v790 = vpop.permute.xlu0 %789
  %793 = vset.pattern.permute.xlu0 0
  %794 = vperm.xlu0 %793, %v768
  %v795 = vpop.permute.xlu0 %794
  %798 = vset.pattern.permute.xlu0 0
  %799 = vperm.xlu0 %798, %v769
  %v800 = vpop.permute.xlu0 %799
  %803 = vset.pattern.permute.xlu0 0
  %804 = vperm.xlu0 %803, %v770
  %v805 = vpop.permute.xlu0 %804
  %808 = vset.pattern.permute.xlu0 0
  %809 = vperm.xlu0 %808, %v771
  %v810 = vpop.permute.xlu0 %809
  %813 = vset.pattern.permute.xlu0 0
  %814 = vperm.xlu0 %813, %v772
  %v815 = vpop.permute.xlu0 %814
  %818 = vset.pattern.permute.xlu0 0
  %819 = vperm.xlu0 %818, %v773
  %v820 = vpop.permute.xlu0 %819
  %823 = vset.pattern.permute.xlu0 0
  %824 = vperm.xlu0 %823, %v774
  %v825 = vpop.permute.xlu0 %824
  %828 = vset.pattern.permute.xlu0 0
  %829 = vperm.xlu0 %828, %v775
  %v830 = vpop.permute.xlu0 %829
  %833 = vset.pattern.permute.xlu0 0
  %834 = vperm.xlu0 %833, %v776
  %v835 = vpop.permute.xlu0 %834
  %838 = vset.pattern.permute.xlu0 0
  %839 = vperm.xlu0 %838, %v777
  %v840 = vpop.permute.xlu0 %839
  %843 = vset.pattern.permute.xlu0 0
  %844 = vperm.xlu0 %843, %v778
  %v845 = vpop.permute.xlu0 %844
  %848 = vset.pattern.permute.xlu0 0
  %849 = vperm.xlu0 %848, %v779
  %v850 = vpop.permute.xlu0 %849
  %853 = vset.pattern.permute.xlu0 0
  %854 = vperm.xlu0 %853, %v780
  %v855 = vpop.permute.xlu0 %854
  %858 = vset.pattern.permute.xlu0 0
  %859 = vperm.xlu0 %858, %v781
  %v860 = vpop.permute.xlu0 %859
  %v878 = vunpack.c.l.b16 %v742
  %v879 = vunpack.c.l.b16 %v743
  %v880 = vunpack.c.l.b16 %v744
  %v881 = vunpack.c.l.b16 %v745
  %v882 = vunpack.c.l.b16 %v746
  %v883 = vunpack.c.l.b16 %v747
  %v884 = vunpack.c.l.b16 %v748
  %v885 = vunpack.c.l.b16 %v749
  %v886 = vunpack.c.l.b16 %v750
  %v887 = vunpack.c.l.b16 %v751
  %v888 = vunpack.c.l.b16 %v752
  %v889 = vunpack.c.l.b16 %v753
  %v890 = vunpack.c.l.b16 %v754
  %v891 = vunpack.c.l.b16 %v755
  %v892 = vunpack.c.l.b16 %v756
  %v893 = vunpack.c.l.b16 %v757
  %v894 = vpack.c.b16 %v879, %v878
  %v895 = vpack.c.b16 %v881, %v880
  %v896 = vpack.c.b16 %v883, %v882
  %v897 = vpack.c.b16 %v885, %v884
  %v898 = vpack.c.b16 %v887, %v886
  %v899 = vpack.c.b16 %v889, %v888
  %v900 = vpack.c.b16 %v891, %v890
  %v901 = vpack.c.b16 %v893, %v892
  %910 = vmatprep.subr.bf16.mxu0 0
  %911 = vmatpush1.bf16.msra.mxu0 %v758
  %912 = vmatprep.subr.bf16.mxu0 0
  %913 = vmatpush1.bf16.msra.mxu0 %v759
  %914 = vmatprep.subr.bf16.mxu0 0
  %915 = vmatpush1.bf16.msra.mxu0 %v760
  %916 = vmatprep.subr.bf16.mxu0 0
  %917 = vmatpush1.bf16.msra.mxu0 %v761
  %918 = vmatprep.subr.bf16.mxu0 0
  %919 = vmatpush1.bf16.msra.mxu0 %v762
  %920 = vmatprep.subr.bf16.mxu0 0
  %921 = vmatpush1.bf16.msra.mxu0 %v763
  %922 = vmatprep.subr.bf16.mxu0 0
  %923 = vmatpush1.bf16.msra.mxu0 %v764
  %924 = vmatprep.subr.bf16.mxu0 0
  %925 = vmatpush1.bf16.msra.mxu0 %v765
  %926 = vmatprep.subr.bf16.mxu0 0
  %927 = vmatpush1.bf16.msra.mxu0 0
  %928 = vmatprep.subr.bf16.mxu0 0
  %929 = vmatpush1.bf16.msra.mxu0 0
  %930 = vmatprep.subr.bf16.mxu0 0
  %931 = vmatpush1.bf16.msra.mxu0 0
  %932 = vmatprep.subr.bf16.mxu0 0
  %933 = vmatpush1.bf16.msra.mxu0 0
  %934 = vmatprep.subr.bf16.mxu0 0
  %935 = vmatpush1.bf16.msra.mxu0 0
  %936 = vmatprep.subr.bf16.mxu0 0
  %937 = vmatpush1.bf16.msra.mxu0 0
  %938 = vmatprep.subr.bf16.mxu0 0
  %939 = vmatpush1.bf16.msra.mxu0 0
  %940 = vmatprep.subr.bf16.mxu0 0
  %941 = vmatpush1.bf16.msra.mxu0 0
  %942 = vmatprep.mubr.bf16.mxu0 0
  %943 = vmatmul.mubr.bf16.gmra.mrb[0].mxu0 %v894
  %v944 = vpop.f32.mrb[0].mxu0
  %v945 = vadd.f32 %v785, %v944
  %v946 = vpop.f32.mrb[0].mxu0
  %v947 = vpop.f32.mrb[0].mxu0
  %v948 = vadd.f32 %v790, %v947
  %v949 = vpop.f32.mrb[0].mxu0
  %950 = vmatprep.mubr.bf16.mxu0 0
  %951 = vmatmul.mubr.bf16.gmra.mrb[0].mxu0 %v895
  %v952 = vpop.f32.mrb[0].mxu0
  %v953 = vadd.f32 %v795, %v952
  %v954 = vpop.f32.mrb[0].mxu0
  %v955 = vpop.f32.mrb[0].mxu0
  %v956 = vadd.f32 %v800, %v955
  %v957 = vpop.f32.mrb[0].mxu0
  %958 = vmatprep.mubr.bf16.mxu0 0
  %959 = vmatmul.mubr.bf16.gmra.mrb[0].mxu0 %v896
  %v960 = vpop.f32.mrb[0].mxu0
  %v961 = vadd.f32 %v805, %v960
  %v962 = vpop.f32.mrb[0].mxu0
  %v963 = vpop.f32.mrb[0].mxu0
  %v964 = vadd.f32 %v810, %v963
  %v965 = vpop.f32.mrb[0].mxu0
  %966 = vmatprep.mubr.bf16.mxu0 0
  %967 = vmatmul.mubr.bf16.gmra.mrb[0].mxu0 %v897
  %v968 = vpop.f32.mrb[0].mxu0
  %v969 = vadd.f32 %v815, %v968
  %v970 = vpop.f32.mrb[0].mxu0
  %v971 = vpop.f32.mrb[0].mxu0
  %v972 = vadd.f32 %v820, %v971
  %v973 = vpop.f32.mrb[0].mxu0
  %974 = vmatprep.mubr.bf16.mxu0 0
  %975 = vmatmul.mubr.bf16.gmra.mrb[0].mxu0 %v898
  %v976 = vpop.f32.mrb[0].mxu0
  %v977 = vadd.f32 %v825, %v976
  %v978 = vpop.f32.mrb[0].mxu0
  %v979 = vpop.f32.mrb[0].mxu0
  %v980 = vadd.f32 %v830, %v979
  %v981 = vpop.f32.mrb[0].mxu0
  %982 = vmatprep.mubr.bf16.mxu0 0
  %983 = vmatmul.mubr.bf16.gmra.mrb[0].mxu0 %v899
  %v984 = vpop.f32.mrb[0].mxu0
  %v985 = vadd.f32 %v835, %v984
  %v986 = vpop.f32.mrb[0].mxu0
  %v987 = vpop.f32.mrb[0].mxu0
  %v988 = vadd.f32 %v840, %v987
  %v989 = vpop.f32.mrb[0].mxu0
  %990 = vmatprep.mubr.bf16.mxu0 0
  %991 = vmatmul.mubr.bf16.gmra.mrb[0].mxu0 %v900
  %v992 = vpop.f32.mrb[0].mxu0
  %v993 = vadd.f32 %v845, %v992
  %v994 = vpop.f32.mrb[0].mxu0
  %v995 = vpop.f32.mrb[0].mxu0
  %v996 = vadd.f32 %v850, %v995
  %v997 = vpop.f32.mrb[0].mxu0
  %998 = vmatprep.mubr.bf16.mxu0 0
  %999 = vmatmul.mubr.bf16.gmra.mrb[0].mxu0 %v901
  %v1000 = vpop.f32.mrb[0].mxu0
  %v1001 = vadd.f32 %v855, %v1000
  %v1002 = vpop.f32.mrb[0].mxu0
  %v1003 = vpop.f32.mrb[0].mxu0
  %v1004 = vadd.f32 %v860, %v1003
  %v1005 = vpop.f32.mrb[0].mxu0
  %1006 = vdwg.mxu0
  %v1007 = vmax.f32 %v945, 0.0
  %v1008 = vmax.f32 %v948, 0.0
  %v1009 = vmax.f32 %v953, 0.0
  %v1010 = vmax.f32 %v956, 0.0
  %v1011 = vmax.f32 %v961, 0.0
  %v1012 = vmax.f32 %v964, 0.0
  %v1013 = vmax.f32 %v969, 0.0
  %v1014 = vmax.f32 %v972, 0.0
  %v1015 = vmax.f32 %v977, 0.0
  %v1016 = vmax.f32 %v980, 0.0
  %v1017 = vmax.f32 %v985, 0.0
  %v1018 = vmax.f32 %v988, 0.0
  %v1019 = vmax.f32 %v993, 0.0
  %v1020 = vmax.f32 %v996, 0.0
  %v1021 = vmax.f32 %v1001, 0.0
  %v1022 = vmax.f32 %v1004, 0.0
  %v1023 = vld [vmem:[%s5] sm:$0xf]
  %v1024 = vld [vmem:[%s5 + $0x4] sm:$0xf]
  %v1025 = vpack.c.bf16 %v1008, %v1007
  %v1026 = vpack.c.bf16 %v1010, %v1009
  %v1027 = vpack.c.bf16 %v1012, %v1011
  %v1028 = vpack.c.bf16 %v1014, %v1013
  %v1029 = vpack.c.bf16 %v1016, %v1015
  %v1030 = vpack.c.bf16 %v1018, %v1017
  %v1031 = vpack.c.bf16 %v1020, %v1019
  %v1032 = vpack.c.bf16 %v1022, %v1021
  %v1033 = vld [vmem:[%s6] sm:$0xff]
  %v1034 = vld [vmem:[%s6 + $0x8] sm:$0xff]
  %1036 = vset.pattern.permute.xlu0 0
  %1037 = vperm.xlu0 %1036, %v1033
  %v1038 = vpop.permute.xlu0 %1037
  %1041 = vset.pattern.permute.xlu0 0
  %1042 = vperm.xlu0 %1041, %v1034
  %v1043 = vpop.permute.xlu0 %1042
  %v1047 = vunpack.c.l.b16 %v1023
  %v1048 = vunpack.c.l.b16 %v1024
  %v1049 = vpack.c.b16 %v1048, %v1047
  %1051 = vmatprep.subr.bf16.mxu0 0
  %1052 = vmatpush1.bf16.msra.mxu0 %v1025
  %1053 = vmatprep.subr.bf16.mxu0 0
  %1054 = vmatpush1.bf16.msra.mxu0 %v1026
  %1055 = vmatprep.subr.bf16.mxu0 0
  %1056 = vmatpush1.bf16.msra.mxu0 %v1027
  %1057 = vmatprep.subr.bf16.mxu0 0
  %1058 = vmatpush1.bf16.msra.mxu0 %v1028
  %1059 = vmatprep.subr.bf16.mxu0 0
  %1060 = vmatpush1.bf16.msra.mxu0 %v1029
  %1061 = vmatprep.subr.bf16.mxu0 0
  %1062 = vmatpush1.bf16.msra.mxu0 %v1030
  %1063 = vmatprep.subr.bf16.mxu0 0
  %1064 = vmatpush1.bf16.msra.mxu0 %v1031
  %1065 = vmatprep.subr.bf16.mxu0 0
  %1066 = vmatpush1.bf16.msra.mxu0 %v1032
  %1067 = vmatprep.subr.bf16.mxu0 0
  %1068 = vmatpush1.bf16.msra.mxu0 0
  %1069 = vmatprep.subr.bf16.mxu0 0
  %1070 = vmatpush1.bf16.msra.mxu0 0
  %1071 = vmatprep.subr.bf16.mxu0 0
  %1072 = vmatpush1.bf16.msra.mxu0 0
  %1073 = vmatprep.subr.bf16.mxu0 0
  %1074 = vmatpush1.bf16.msra.mxu0 0
  %1075 = vmatprep.subr.bf16.mxu0 0
  %1076 = vmatpush1.bf16.msra.mxu0 0
  %1077 = vmatprep.subr.bf16.mxu0 0
  %1078 = vmatpush1.bf16.msra.mxu0 0
  %1079 = vmatprep.subr.bf16.mxu0 0
  %1080 = vmatpush1.bf16.msra.mxu0 0
  %1081 = vmatprep.subr.bf16.mxu0 0
  %1082 = vmatpush1.bf16.msra.mxu0 0
  %1083 = vmatprep.mubr.bf16.mxu0 0
  %1084 = vmatmul.mubr.bf16.gmra.mrb[0].mxu0 %v1049
  %v1085 = vpop.f32.mrb[0].mxu0
  %v1086 = vadd.f32 %v1038, %v1085
  %v1087 = vpop.f32.mrb[0].mxu0
  %v1088 = vpop.f32.mrb[0].mxu0
  %v1089 = vadd.f32 %v1043, %v1088
  %v1090 = vpop.f32.mrb[0].mxu0
  %1091 = vdwg.mxu0
  %1092 = vst [vmem:[%s7] sm:$0xff] %v1086
  %1093 = vst [vmem:[%s7 + $0x8] sm:$0xff] %v1089
  // Predicated region
  $region30: #{net_forward.5} parent=0 // pred_check
    _
  $region31: #{net_forward.5} parent=0 // pred_check_branch
    %1095 = sbr.rel (0) target = $region33
  $region32: #{net_forward.5} parent=0 // pred_region
    _
  $region33: #{net_forward.5} parent=0 // pred_fallthru
    _
  // Predicated region
  $region34: #{net_forward.5} parent=0 // pred_check
    _
  $region35: #{net_forward.5} parent=0 // pred_check_branch
    %1097 = sbr.rel (0) target = $region37
  $region36: #{net_forward.5} parent=0 // pred_region
    _
  $region37: #{net_forward.5} parent=0 // pred_fallthru
    _

</llo_original>
